<compile_context>
chip_gen: v7x
topology: tpu7x:2x2x1
jax: 0.10.0
libtpu: 0.0.40
codegen_flags: <defaults>
</compile_context>

<pallas_src>
import math
from functools import partial

import jax
import jax.numpy as jnp
from jax.experimental import pallas as pl
from jax.experimental.pallas import tpu as pltpu


def _self_attent_kernel(emb_ref, bias_ref,
                        wq_ref, bq_ref, wkv_ref, bkv_ref, wo_ref, bo_ref,
                        out_ref,
                        k_scr, v_scr,
                        *, heads, d_query, q_tile, kv_tile):
    qt = pl.program_id(1)                      # query-tile index
    S = emb_ref.shape[1]
    D = heads * d_query
    n_kv = S // kv_tile
    cdt = k_scr.dtype                          # MXU compute dtype (bf16 or f32)
    scale = 1.0 / math.sqrt(d_query)

    # --- K/V projections: once per batch element, reused by every q tile.
    #     One fused (S,D)x(D,2D) matmul, immediate cast to compute dtype, then
    #     one 2-D transpose + leading-dim reshapes into per-head scratch:
    #       K scratch (H, dq, S): contraction dim dq on rhs sublanes, lanes = S
    #       V scratch (H, S, dq): contraction dim S on rhs sublanes
    @pl.when(qt == 0)
    def _():
        x_all = emb_ref[0]                                            # (S, D)
        kv2d = (jnp.dot(x_all, wkv_ref[...],
                        preferred_element_type=jnp.float32)
                + bkv_ref[...]).astype(cdt)                           # (S, 2D)
        kvT = kv2d.T                                                  # (2D, S)
        k_scr[...] = kvT[:D, :].reshape(heads, d_query, S)            # (H, dq, S)
        v_scr[...] = jnp.transpose(
            kvT[D:, :].reshape(heads, d_query, S), (0, 2, 1))          # (H, S, dq)

    # --- Q projection for this query tile (pre-scaled by 1/sqrt(dq)). ---
    start_q = pl.multiple_of(qt * q_tile, q_tile)
    x_q = emb_ref[0, pl.ds(start_q, q_tile), :]                       # (tq, D)
    q2d = ((jnp.dot(x_q, wq_ref[...], preferred_element_type=jnp.float32)
            + bq_ref[...]) * scale).astype(cdt)
    q = jnp.transpose(q2d.T.reshape(heads, d_query, q_tile), (0, 2, 1))  # (H, tq, dq)

    # --- Head-batched attention over KV chunks with an online softmax:
    #     live scores are (H, tq, kv_tile), never (H, tq, S). ---
    m_i = jnp.full((heads, q_tile, 1), -jnp.inf, dtype=jnp.float32)
    l_i = jnp.zeros((heads, q_tile, 1), dtype=jnp.float32)
    acc = jnp.zeros((heads, q_tile, d_query), dtype=jnp.float32)
    for kt in range(n_kv):                                            # static trip count
        c0 = kt * kv_tile
        k_blk = k_scr[:, :, c0:c0 + kv_tile]                          # (H, dq, tk)
        v_blk = v_scr[:, c0:c0 + kv_tile, :]                          # (H, tk, dq)
        b_blk = bias_ref[0, :, c0:c0 + kv_tile].astype(jnp.float32)   # (tq, tk)

        s = jnp.einsum('hqd,hdk->hqk', q, k_blk,
                       preferred_element_type=jnp.float32)            # (H, tq, tk)
        # additive mask bias (0 / -1e9), broadcast once over all heads.
        # NOTE: a row whose keys are ALL masked yields softmax(raw scores)
        # instead of masked_fill's uniform attention; identical otherwise.
        s = s + b_blk[None, :, :]

        m_new = jnp.maximum(m_i, jnp.max(s, axis=-1, keepdims=True))
        alpha = jnp.exp(m_i - m_new)
        p = jnp.exp(s - m_new)
        l_i = alpha * l_i + jnp.sum(p, axis=-1, keepdims=True)
        acc = alpha * acc + jnp.einsum('hqk,hkd->hqd', p.astype(cdt), v_blk,
                                       preferred_element_type=jnp.float32)
        m_i = m_new

    ctx = (acc * pl.reciprocal(l_i, approx=True)).astype(cdt)         # (H, tq, dq)

    # --- Output projection: reassemble heads to (tq, D) with cheap XLU moves,
    #     then ONE full-depth (tq, D) x (D, D) MXU matmul. ---
    ctx2d = jnp.transpose(ctx, (0, 2, 1)).reshape(D, q_tile).T        # (tq, D)
    out2d = jnp.dot(ctx2d, wo_ref[...],
                    preferred_element_type=jnp.float32) + bo_ref[...]
    out_ref[0] = out2d.astype(out_ref.dtype)


def self_attent(embedding, mask, params, *, heads, d_query,
                q_tile=None, kv_tile=None, compute_dtype=jnp.bfloat16):
    B, S, D = embedding.shape
    assert D == heads * d_query

    # Query tile: fill the 256-wide MXU on v6e/v7x when possible; full-S tile
    # for short sequences (v5e's 128x128 MXU simply takes two passes at 256).
    if q_tile is None:
        if S <= 256:
            q_tile = S
        elif S % 256 == 0:
            q_tile = 256
        else:
            q_tile = 128
    # TODO(synk): pad the sequence when S is not a multiple of the tile sizes.
    assert S % q_tile == 0
    n_q = S // q_tile

    # KV tile bounds the live (H, q_tile, kv_tile) f32 score block.
    if kv_tile is None:
        kv_tile = S if S <= 512 else 512
    if S % kv_tile != 0:
        kv_tile = S

    out_dtype = embedding.dtype
    cdt = compute_dtype

    # MXU operands in the compute dtype (bf16 is the native MXU dtype on every
    # generation, v5e included, and halves weight/activation DMA); biases and
    # accumulation stay f32.  Wk|Wv fused into one (D, 2D) weight.
    emb_c = embedding.astype(cdt)
    wq = params["wq"].astype(cdt)
    wkv = jnp.concatenate([params["wk"], params["wv"]], axis=1).astype(cdt)   # (D, 2D)
    wo = params["wo"].astype(cdt)
    bq = params["bq"].astype(jnp.float32)
    bkv = jnp.concatenate([params["bk"], params["bv"]], axis=1).astype(jnp.float32)
    bo = params["bo"].astype(jnp.float32)

    # Mask as a precomputed additive bf16 bias: 4x less HBM traffic than int32
    # and a single add instead of compare+select inside the kernel.
    mask_bias = jnp.where(mask == 0, -1e9, 0.0).astype(jnp.bfloat16)

    kernel = partial(_self_attent_kernel, heads=heads, d_query=d_query,
                     q_tile=q_tile, kv_tile=kv_tile)

    # Constant index maps -> weight/bias blocks are DMA'd once, not per step.
    # TODO(synk): pipeline_mode=pl.Buffered(1) on these constant blocks would
    # also drop their second (dead) pipeline buffer on VMEM-tight chips.
    wq_spec = pl.BlockSpec((D, D), lambda b, qt: (0, 0))
    wkv_spec = pl.BlockSpec((D, 2 * D), lambda b, qt: (0, 0))
    wo_spec = pl.BlockSpec((D, D), lambda b, qt: (0, 0))
    bq_spec = pl.BlockSpec((1, D), lambda b, qt: (0, 0))
    bkv_spec = pl.BlockSpec((1, 2 * D), lambda b, qt: (0, 0))
    bo_spec = pl.BlockSpec((1, D), lambda b, qt: (0, 0))

    # VMEM budget: derive from the chip, leave headroom for pipeline buffers
    # and internal scratch (~54 MiB on v7x / ~108 MiB on v5e/v6e).
    try:
        vmem_cap = pltpu.get_tpu_info().vmem_capacity_bytes
    except Exception:
        vmem_cap = 128 * 1024 * 1024
    vmem_limit = int(vmem_cap * 0.85)

    return pl.pallas_call(
        kernel,
        out_shape=jax.ShapeDtypeStruct((B, S, D), out_dtype),
        grid=(B, n_q),
        in_specs=[
            pl.BlockSpec((1, S, D), lambda b, qt: (b, 0, 0)),        # embedding (full seq for K/V)
            pl.BlockSpec((1, q_tile, S), lambda b, qt: (b, qt, 0)),  # additive mask bias rows
            wq_spec, bq_spec,                                        # Wq, bq
            wkv_spec, bkv_spec,                                      # [Wk|Wv], [bk|bv]
            wo_spec, bo_spec,                                        # Wo, bo
        ],
        out_specs=pl.BlockSpec((1, q_tile, D), lambda b, qt: (b, qt, 0)),
        scratch_shapes=[
            pltpu.VMEM((heads, d_query, S), cdt),   # K (per-head, transposed), persists over q tiles
            pltpu.VMEM((heads, S, d_query), cdt),   # V (per-head), persists over q tiles
        ],
        compiler_params=pltpu.CompilerParams(
            # Batch axis is megacore-parallel; the q-tile axis must stay
            # sequential because K/V scratch is filled at qt == 0 and reused.
            # TODO(synk): for v7x with a tiny per-chip batch, precompute K/V
            # outside the kernel so the q-tile axis can also be parallel.
            dimension_semantics=("parallel", "arbitrary"),
            vmem_limit_bytes=vmem_limit,
        ),
    )(emb_c, mask_bias, wq, bq, wkv, bkv, wo, bo)


def _reference(embedding, mask, params, *, heads, d_query):
    """Pure-JAX (f32) mirror of the PyTorch forward pass for validation."""
    B, S, D = embedding.shape

    def lin(x, w, b):
        return x @ w + b

    q = lin(embedding, params["wq"], params["bq"])
    k = lin(embedding, params["wk"], params["bk"])
    v = lin(embedding, params["wv"], params["bv"])
    q, k, v = [t.reshape(B, S, heads, d_query).transpose(0, 2, 1, 3) for t in (q, k, v)]
    scores = jnp.einsum("bhqd,bhkd->bhqk", q, k) / math.sqrt(d_query)
    scores = jnp.where(mask[:, None, :, :] == 0, -1e9, scores)
    p = jax.nn.softmax(scores, axis=-1)
    ctx = jnp.einsum("bhqk,bhkd->bhqd", p, v)
    ctx = ctx.transpose(0, 2, 1, 3).reshape(B, S, D)
    return lin(ctx, params["wo"], params["bo"])


def _init_params(key, d_model):
    """Deterministic Linear params (PyTorch convention W:[out,in]); stored transposed."""
    params = {}
    names = ["q", "k", "v", "o"]
    keys = jax.random.split(key, 2 * len(names))
    bound = 1.0 / math.sqrt(d_model)
    for i, n in enumerate(names):
        w = jax.random.uniform(keys[2 * i], (d_model, d_model),
                               minval=-bound, maxval=bound, dtype=jnp.float32)
        b = jax.random.uniform(keys[2 * i + 1], (d_model,),
                               minval=-bound, maxval=bound, dtype=jnp.float32)
        params["w" + n] = w.T                 # pass as [in, out] so kernel does x @ W
        params["b" + n] = b.reshape(1, d_model)
    return params


if __name__ == "__main__":
    B, S, d_model = 2, 8, 32
    heads, d_query = 4, 8

    key = jax.random.PRNGKey(0)
    k_emb, k_par = jax.random.split(key)

    embedding = jax.random.normal(k_emb, (B, S, d_model), dtype=jnp.float32)

    # padding-style mask: batch 0 attends to all 8 positions, batch 1 to first 5
    lens = jnp.array([8, 5], dtype=jnp.int32)
    mask = (jnp.arange(S)[None, None, :] < lens[:, None, None]).astype(jnp.int32)
    mask = jnp.broadcast_to(mask, (B, S, S))

    params = _init_params(k_par, d_model)
    ref = _reference(embedding, mask, params, heads=heads, d_query=d_query)

    # f32 compute path: tight structural check (approx reciprocal bounds rel err).
    out_f32 = self_attent(embedding, mask, params, heads=heads, d_query=d_query,
                          compute_dtype=jnp.float32)
    out_f32 = jax.block_until_ready(out_f32)
    assert out_f32.shape == (B, S, d_model)
    assert jnp.allclose(out_f32, ref, atol=5e-3, rtol=5e-3), "f32 path mismatch vs reference"

    # bf16 MXU operands + f32 accumulation (default fast path on all gens).
    out_bf16 = self_attent(embedding, mask, params, heads=heads, d_query=d_query)
    out_bf16 = jax.block_until_ready(out_bf16)
    assert jnp.allclose(out_bf16, ref, atol=1e-1, rtol=1e-1), "bf16 path mismatch vs reference"

    # Exercise the multi-chunk online-softmax (KV-tiled) path at small shapes.
    out_kv = self_attent(embedding, mask, params, heads=heads, d_query=d_query,
                         kv_tile=4, compute_dtype=jnp.float32)
    out_kv = jax.block_until_ready(out_kv)
    assert jnp.allclose(out_kv, ref, atol=5e-3, rtol=5e-3), "kv-tiled path mismatch vs reference"

    print("KERNEL_OK")
</pallas_src>

<mosaic_0001>
module attributes {stable_mosaic.version = 11 : i64} {
  func.func @_self_attent_kernel(%arg0: i32, %arg1: i32, %arg2: memref<1x8x32xf32, #tpu.memory_space<vmem>>, %arg3: memref<1x8x8xbf16, #tpu.memory_space<vmem>>, %arg4: memref<32x32xf32, #tpu.memory_space<vmem>>, %arg5: memref<1x32xf32, #tpu.memory_space<vmem>>, %arg6: memref<32x64xf32, #tpu.memory_space<vmem>>, %arg7: memref<1x64xf32, #tpu.memory_space<vmem>>, %arg8: memref<32x32xf32, #tpu.memory_space<vmem>>, %arg9: memref<1x32xf32, #tpu.memory_space<vmem>>, %arg10: memref<1x8x32xf32, #tpu.memory_space<vmem>>, %arg11: memref<4x8x8xf32, #tpu.memory_space<vmem>>, %arg12: memref<4x8x8xf32, #tpu.memory_space<vmem>>) attributes {dimension_semantics = [#tpu.dimension_semantics<parallel>, #tpu.dimension_semantics<arbitrary>], iteration_bounds = array<i64: 2, 1>, scalar_prefetch = 0 : i64, scratch_operands = 2 : i64, tpu.core_type = #tpu.core_type<tc>, window_params = [{transform_indices = @transform_0, window_bounds = array<i64: 1, 8, 32>}, {transform_indices = @transform_1, window_bounds = array<i64: 1, 8, 8>}, {pipeline_mode = #tpu.pipeline_mode<synchronous>, transform_indices = @transform_2, window_bounds = array<i64: 32, 32>}, {pipeline_mode = #tpu.pipeline_mode<synchronous>, transform_indices = @transform_3, window_bounds = array<i64: 1, 32>}, {pipeline_mode = #tpu.pipeline_mode<synchronous>, transform_indices = @transform_4, window_bounds = array<i64: 32, 64>}, {pipeline_mode = #tpu.pipeline_mode<synchronous>, transform_indices = @transform_5, window_bounds = array<i64: 1, 64>}, {pipeline_mode = #tpu.pipeline_mode<synchronous>, transform_indices = @transform_6, window_bounds = array<i64: 32, 32>}, {pipeline_mode = #tpu.pipeline_mode<synchronous>, transform_indices = @transform_7, window_bounds = array<i64: 1, 32>}, {transform_indices = @transform_8, window_bounds = array<i64: 1, 8, 32>}]} {
    %c0_i32 = arith.constant 0 : i32
    %0 = arith.cmpi eq, %arg1, %c0_i32 : i32
    %1 = arith.extui %0 : i1 to i32
    %c0_i32_0 = arith.constant 0 : i32
    %2 = arith.cmpi ne, %1, %c0_i32_0 : i32
    scf.if %2 {
      %c0_31 = arith.constant 0 : index
      %c0_32 = arith.constant 0 : index
      %c0_33 = arith.constant 0 : index
      %60 = vector.load %arg2[%c0_31, %c0_32, %c0_33] : memref<1x8x32xf32, #tpu.memory_space<vmem>>, vector<1x8x32xf32>
      %61 = vector.shape_cast %60 : vector<1x8x32xf32> to vector<8x32xf32>
      %c0_34 = arith.constant 0 : index
      %c0_35 = arith.constant 0 : index
      %62 = vector.load %arg6[%c0_34, %c0_35] : memref<32x64xf32, #tpu.memory_space<vmem>>, vector<32x64xf32>
      %cst_36 = arith.constant dense<0.000000e+00> : vector<8x64xf32>
      %63 = tpu.matmul %61, %62, %cst_36 {dimension_numbers = #tpu.dot_dimension_numbers<[1], [0], [0], [1], [0, 0, 1, 1], [], []>} : vector<8x32xf32>, vector<32x64xf32>, vector<8x64xf32> -> vector<8x64xf32>
      %c0_37 = arith.constant 0 : index
      %c0_38 = arith.constant 0 : index
      %64 = vector.load %arg7[%c0_37, %c0_38] : memref<1x64xf32, #tpu.memory_space<vmem>>, vector<1x64xf32>
      %65 = vector.broadcast %64 : vector<1x64xf32> to vector<8x64xf32>
      %66 = arith.addf %63, %65 : vector<8x64xf32>
      %67 = tpu.transpose %66, [1, 0] : vector<8x64xf32> -> vector<64x8xf32>
      %68 = vector.extract_strided_slice %67 {offsets = [0, 0], sizes = [32, 8], strides = [1, 1]} : vector<64x8xf32> to vector<32x8xf32>
      %69 = vector.shape_cast %68 : vector<32x8xf32> to vector<4x8x8xf32>
      %c0_39 = arith.constant 0 : index
      %c0_40 = arith.constant 0 : index
      %c0_41 = arith.constant 0 : index
      %70 = vector.load %arg11[%c0_39, %c0_40, %c0_41] : memref<4x8x8xf32, #tpu.memory_space<vmem>>, vector<4x8x8xf32>
      tpu.vector_store %arg11[%c0_39, %c0_40, %c0_41], %69 {strides = array<i32>} : memref<4x8x8xf32, #tpu.memory_space<vmem>>, vector<4x8x8xf32>,
      %71 = vector.extract_strided_slice %67 {offsets = [32, 0], sizes = [32, 8], strides = [1, 1]} : vector<64x8xf32> to vector<32x8xf32>
      %72 = vector.shape_cast %71 : vector<32x8xf32> to vector<4x8x8xf32>
      %73 = tpu.transpose %72, [0, 2, 1] : vector<4x8x8xf32> -> vector<4x8x8xf32>
      %c0_42 = arith.constant 0 : index
      %c0_43 = arith.constant 0 : index
      %c0_44 = arith.constant 0 : index
      %74 = vector.load %arg12[%c0_42, %c0_43, %c0_44] : memref<4x8x8xf32, #tpu.memory_space<vmem>>, vector<4x8x8xf32>
      tpu.vector_store %arg12[%c0_42, %c0_43, %c0_44], %73 {strides = array<i32>} : memref<4x8x8xf32, #tpu.memory_space<vmem>>, vector<4x8x8xf32>,
    } else {
    }
    %c8_i32 = arith.constant 8 : i32
    %3 = arith.muli %arg1, %c8_i32 : i32
    %4 = tpu.assume_multiple %3, 8 : i32
    %c0 = arith.constant 0 : index
    %5 = arith.index_cast %4 : i32 to index
    %c0_1 = arith.constant 0 : index
    %6 = vector.load %arg2[%c0, %5, %c0_1] : memref<1x8x32xf32, #tpu.memory_space<vmem>>, vector<1x8x32xf32>
    %7 = vector.shape_cast %6 : vector<1x8x32xf32> to vector<8x32xf32>
    %c0_2 = arith.constant 0 : index
    %c0_3 = arith.constant 0 : index
    %8 = vector.load %arg4[%c0_2, %c0_3] : memref<32x32xf32, #tpu.memory_space<vmem>>, vector<32x32xf32>
    %cst = arith.constant dense<0.000000e+00> : vector<8x32xf32>
    %9 = tpu.matmul %7, %8, %cst {dimension_numbers = #tpu.dot_dimension_numbers<[1], [0], [0], [1], [0, 0, 1, 1], [], []>} : vector<8x32xf32>, vector<32x32xf32>, vector<8x32xf32> -> vector<8x32xf32>
    %c0_4 = arith.constant 0 : index
    %c0_5 = arith.constant 0 : index
    %10 = vector.load %arg5[%c0_4, %c0_5] : memref<1x32xf32, #tpu.memory_space<vmem>>, vector<1x32xf32>
    %11 = vector.broadcast %10 : vector<1x32xf32> to vector<8x32xf32>
    %12 = arith.addf %9, %11 : vector<8x32xf32>
    %cst_6 = arith.constant 0.353553385 : f32
    %13 = vector.broadcast %cst_6 : f32 to vector<8x32xf32>
    %14 = arith.mulf %12, %13 : vector<8x32xf32>
    %15 = tpu.transpose %14, [1, 0] : vector<8x32xf32> -> vector<32x8xf32>
    %16 = vector.shape_cast %15 : vector<32x8xf32> to vector<4x8x8xf32>
    %17 = tpu.transpose %16, [0, 2, 1] : vector<4x8x8xf32> -> vector<4x8x8xf32>
    %cst_7 = arith.constant 0xFF800000 : f32
    %18 = vector.broadcast %cst_7 : f32 to vector<4x8x1xf32>
    %cst_8 = arith.constant 0.000000e+00 : f32
    %19 = vector.broadcast %cst_8 : f32 to vector<4x8x1xf32>
    %cst_9 = arith.constant 0.000000e+00 : f32
    %20 = vector.broadcast %cst_9 : f32 to vector<4x8x8xf32>
    %c0_10 = arith.constant 0 : index
    %c0_11 = arith.constant 0 : index
    %c0_12 = arith.constant 0 : index
    %21 = vector.load %arg11[%c0_10, %c0_11, %c0_12] : memref<4x8x8xf32, #tpu.memory_space<vmem>>, vector<4x8x8xf32>
    %c0_13 = arith.constant 0 : index
    %c0_14 = arith.constant 0 : index
    %c0_15 = arith.constant 0 : index
    %22 = vector.load %arg12[%c0_13, %c0_14, %c0_15] : memref<4x8x8xf32, #tpu.memory_space<vmem>>, vector<4x8x8xf32>
    %c0_16 = arith.constant 0 : index
    %c0_17 = arith.constant 0 : index
    %c0_18 = arith.constant 0 : index
    %23 = vector.load %arg3[%c0_16, %c0_17, %c0_18] : memref<1x8x8xbf16, #tpu.memory_space<vmem>>, vector<1x8x8xbf16>
    %24 = vector.shape_cast %23 : vector<1x8x8xbf16> to vector<8x8xbf16>
    %25 = arith.extf %24 : vector<8x8xbf16> to vector<8x8xf32>
    "tpu.trace_start"() <{level = 10 : i32, message = "hqd,hdk->hqk"}> : () -> ()
    %cst_19 = arith.constant dense<0.000000e+00> : vector<4x8x8xf32>
    %26 = tpu.matmul %17, %21, %cst_19 {dimension_numbers = #tpu.dot_dimension_numbers<[2], [1], [1], [2], [0, 0, 0, 1, 1, 2], [0], [0]>} : vector<4x8x8xf32>, vector<4x8x8xf32>, vector<4x8x8xf32> -> vector<4x8x8xf32>
    "tpu.trace_stop"() : () -> ()
    %27 = vector.shape_cast %25 : vector<8x8xf32> to vector<1x8x8xf32>
    %28 = vector.broadcast %27 : vector<1x8x8xf32> to vector<4x8x8xf32>
    %29 = arith.addf %26, %28 : vector<4x8x8xf32>
    %cst_20 = arith.constant dense<0xFF800000> : vector<4x8xf32>
    %30 = vector.multi_reduction <maximumf>, %29, %cst_20 [2] : vector<4x8x8xf32> to vector<4x8xf32>
    %31 = vector.shape_cast %30 : vector<4x8xf32> to vector<4x8x1xf32>
    %32 = arith.maximumf %18, %31 : vector<4x8x1xf32>
    %33 = arith.subf %18, %32 : vector<4x8x1xf32>
    %34 = math.exp %33 : vector<4x8x1xf32>
    %35 = vector.broadcast %32 : vector<4x8x1xf32> to vector<4x8x8xf32>
    %36 = arith.subf %29, %35 : vector<4x8x8xf32>
    %37 = math.exp %36 : vector<4x8x8xf32>
    %38 = arith.mulf %34, %19 : vector<4x8x1xf32>
    %cst_21 = arith.constant dense<0.000000e+00> : vector<4x8xf32>
    %39 = vector.multi_reduction <add>, %37, %cst_21 [2] : vector<4x8x8xf32> to vector<4x8xf32>
    %40 = vector.shape_cast %39 : vector<4x8xf32> to vector<4x8x1xf32>
    %41 = arith.addf %38, %40 : vector<4x8x1xf32>
    %42 = vector.broadcast %34 : vector<4x8x1xf32> to vector<4x8x8xf32>
    %43 = arith.mulf %42, %20 : vector<4x8x8xf32>
    "tpu.trace_start"() <{level = 10 : i32, message = "hqk,hkd->hqd"}> : () -> ()
    %cst_22 = arith.constant dense<0.000000e+00> : vector<4x8x8xf32>
    %44 = tpu.matmul %37, %22, %cst_22 {dimension_numbers = #tpu.dot_dimension_numbers<[2], [1], [1], [2], [0, 0, 0, 1, 1, 2], [0], [0]>} : vector<4x8x8xf32>, vector<4x8x8xf32>, vector<4x8x8xf32> -> vector<4x8x8xf32>
    "tpu.trace_stop"() : () -> ()
    %45 = arith.addf %43, %44 : vector<4x8x8xf32>
    %46 = tpu.reciprocal %41 {approx = true} : vector<4x8x1xf32> -> vector<4x8x1xf32>
    %47 = vector.broadcast %46 : vector<4x8x1xf32> to vector<4x8x8xf32>
    %48 = arith.mulf %45, %47 : vector<4x8x8xf32>
    %49 = tpu.transpose %48, [0, 2, 1] : vector<4x8x8xf32> -> vector<4x8x8xf32>
    %50 = vector.shape_cast %49 : vector<4x8x8xf32> to vector<32x8xf32>
    %51 = tpu.transpose %50, [1, 0] : vector<32x8xf32> -> vector<8x32xf32>
    %c0_23 = arith.constant 0 : index
    %c0_24 = arith.constant 0 : index
    %52 = vector.load %arg8[%c0_23, %c0_24] : memref<32x32xf32, #tpu.memory_space<vmem>>, vector<32x32xf32>
    %cst_25 = arith.constant dense<0.000000e+00> : vector<8x32xf32>
    %53 = tpu.matmul %51, %52, %cst_25 {dimension_numbers = #tpu.dot_dimension_numbers<[1], [0], [0], [1], [0, 0, 1, 1], [], []>} : vector<8x32xf32>, vector<32x32xf32>, vector<8x32xf32> -> vector<8x32xf32>
    %c0_26 = arith.constant 0 : index
    %c0_27 = arith.constant 0 : index
    %54 = vector.load %arg9[%c0_26, %c0_27] : memref<1x32xf32, #tpu.memory_space<vmem>>, vector<1x32xf32>
    %55 = vector.broadcast %54 : vector<1x32xf32> to vector<8x32xf32>
    %56 = arith.addf %53, %55 : vector<8x32xf32>
    %c0_28 = arith.constant 0 : index
    %c0_29 = arith.constant 0 : index
    %c0_30 = arith.constant 0 : index
    %57 = vector.load %arg10[%c0_28, %c0_29, %c0_30] : memref<1x8x32xf32, #tpu.memory_space<vmem>>, vector<1x8x32xf32>
    %58 = vector.shape_cast %57 : vector<1x8x32xf32> to vector<8x32xf32>
    %59 = vector.shape_cast %56 : vector<8x32xf32> to vector<1x8x32xf32>
    tpu.vector_store %arg10[%c0_28, %c0_29, %c0_30], %59 {strides = array<i32>} : memref<1x8x32xf32, #tpu.memory_space<vmem>>, vector<1x8x32xf32>,
    return
  }
  func.func @transform_0(%arg0: i32, %arg1: i32) -> (i32, i32, i32) {
    %c0_i32 = arith.constant 0 : i32
    %c0_i32_0 = arith.constant 0 : i32
    %c0_i32_1 = arith.constant 0 : i32
    return %arg0, %c0_i32, %c0_i32_0 : i32, i32, i32
  }
  func.func @transform_1(%arg0: i32, %arg1: i32) -> (i32, i32, i32) {
    %c0_i32 = arith.constant 0 : i32
    %c0_i32_0 = arith.constant 0 : i32
    return %arg0, %arg1, %c0_i32 : i32, i32, i32
  }
  func.func @transform_2(%arg0: i32, %arg1: i32) -> (i32, i32) {
    %c0_i32 = arith.constant 0 : i32
    %c0_i32_0 = arith.constant 0 : i32
    %c0_i32_1 = arith.constant 0 : i32
    return %c0_i32, %c0_i32_0 : i32, i32
  }
  func.func @transform_3(%arg0: i32, %arg1: i32) -> (i32, i32) {
    %c0_i32 = arith.constant 0 : i32
    %c0_i32_0 = arith.constant 0 : i32
    %c0_i32_1 = arith.constant 0 : i32
    return %c0_i32, %c0_i32_0 : i32, i32
  }
  func.func @transform_4(%arg0: i32, %arg1: i32) -> (i32, i32) {
    %c0_i32 = arith.constant 0 : i32
    %c0_i32_0 = arith.constant 0 : i32
    %c0_i32_1 = arith.constant 0 : i32
    return %c0_i32, %c0_i32_0 : i32, i32
  }
  func.func @transform_5(%arg0: i32, %arg1: i32) -> (i32, i32) {
    %c0_i32 = arith.constant 0 : i32
    %c0_i32_0 = arith.constant 0 : i32
    %c0_i32_1 = arith.constant 0 : i32
    return %c0_i32, %c0_i32_0 : i32, i32
  }
  func.func @transform_6(%arg0: i32, %arg1: i32) -> (i32, i32) {
    %c0_i32 = arith.constant 0 : i32
    %c0_i32_0 = arith.constant 0 : i32
    %c0_i32_1 = arith.constant 0 : i32
    return %c0_i32, %c0_i32_0 : i32, i32
  }
  func.func @transform_7(%arg0: i32, %arg1: i32) -> (i32, i32) {
    %c0_i32 = arith.constant 0 : i32
    %c0_i32_0 = arith.constant 0 : i32
    %c0_i32_1 = arith.constant 0 : i32
    return %c0_i32, %c0_i32_0 : i32, i32
  }
  func.func @transform_8(%arg0: i32, %arg1: i32) -> (i32, i32, i32) {
    %c0_i32 = arith.constant 0 : i32
    %c0_i32_0 = arith.constant 0 : i32
    return %arg0, %arg1, %c0_i32 : i32, i32, i32
  }
}

</mosaic_0001>

<llo_original>
// kernel: tpu_custom_call.1
$region0: #{tpu_custom_call.1}
  #allocation0 [shape = 'u32[]', space=smem, size = 0x4, offset = 0x4, fixed_abs, tag = 'smem constant byte address 0x4 - core index']
  #allocation1 [shape = 'u32[144,128]{1,0:T(1,128)}', space=vmem, size = 0x12000, scoped, tag = 'internal scratch']
  #allocation2 [shape = 'f32[4,8,8]{2,1,0:T(8,128)}', space=vmem, size = 0x4000, scoped, tag = 'scratch operand']
  #allocation3 [shape = 'f32[4,8,8]{2,1,0:T(8,128)}', space=vmem, size = 0x4000, scoped, tag = 'scratch operand']
  %s0 = inlined_call_operand.hbm [shape: f32[2,8,32], index: 0, kind: input, shape index: {}]
  %s1 = inlined_call_operand.hbm [shape: bf16[2,8,8], index: 1, kind: input, shape index: {}]
  %s2 = inlined_call_operand.hbm [shape: f32[32,32], index: 2, kind: input, shape index: {}]
  %s3 = inlined_call_operand.hbm [shape: f32[1,32], index: 3, kind: input, shape index: {}]
  %s4 = inlined_call_operand.hbm [shape: f32[32,64], index: 4, kind: input, shape index: {}]
  %s5 = inlined_call_operand.hbm [shape: f32[1,64], index: 5, kind: input, shape index: {}]
  %s6 = inlined_call_operand.hbm [shape: f32[32,32], index: 6, kind: input, shape index: {}]
  %s7 = inlined_call_operand.hbm [shape: f32[1,32], index: 7, kind: input, shape index: {}]
  %s8 = inlined_call_operand.hbm [shape: f32[2,8,32], index: 8, kind: output, shape index: {}]
  %s9 = sld [smem:[#allocation0]]
  $region101: #{tpu_custom_call.1} parent=0
    _
  %s11 = ssub.s32 1, %s9
  %s12 = scalar_select 0, %s11, %s9
  $region1: #{tpu_custom_call.1} parent=0
    #allocation4 [shape = 'u8[8192]{0}', space=vmem, size = 0x2000, scoped, tag = 'input window, operand 0']
    #allocation5 [shape = 's32[2]{0}', space=sflag, size = 0x8, scoped, tag = 'scoped memory for tpu_custom_call.1']
    #allocation6 [shape = 's32[2]{0}', space=sflag, size = 0x8, scoped, tag = 'scoped memory for tpu_custom_call.1']
    #allocation7 [shape = 'u8[4096]{0}', space=vmem, size = 0x1000, scoped, tag = 'input window, operand 1']
    #allocation8 [shape = 's32[2]{0}', space=sflag, size = 0x8, scoped, tag = 'scoped memory for tpu_custom_call.1']
    #allocation9 [shape = 'u8[16384]{0}', space=vmem, size = 0x4000, scoped, tag = 'input window, operand 2, single buffered']
    #allocation10 [shape = 'u8[512]{0}', space=vmem, size = 0x400, scoped, tag = 'input window, operand 3, single buffered']
    #allocation11 [shape = 's32[1]{0}', space=sflag, size = 0x4, scoped, tag = 'scoped memory for tpu_custom_call.1']
    #allocation12 [shape = 'u8[16384]{0}', space=vmem, size = 0x4000, scoped, tag = 'input window, operand 4, single buffered']
    #allocation13 [shape = 'u8[512]{0}', space=vmem, size = 0x400, scoped, tag = 'input window, operand 5, single buffered']
    #allocation14 [shape = 's32[1]{0}', space=sflag, size = 0x4, scoped, tag = 'scoped memory for tpu_custom_call.1']
    #allocation15 [shape = 'u8[16384]{0}', space=vmem, size = 0x4000, scoped, tag = 'input window, operand 6, single buffered']
    #allocation16 [shape = 'u8[512]{0}', space=vmem, size = 0x400, scoped, tag = 'input window, operand 7, single buffered']
    #allocation17 [shape = 's32[1]{0}', space=sflag, size = 0x4, scoped, tag = 'scoped memory for tpu_custom_call.1']
    #allocation18 [shape = 'u8[8192]{0}', space=vmem, size = 0x2000, scoped, tag = 'output window, operand 0']
    %13 = vsyncpa [#allocation5], 0
    %s14 = scalar_lea.sflag [#allocation5], 1
    %15 = vsyncpa %s14, 0
    %16 = vsyncpa [#allocation8], 0
    %s17 = scalar_lea.sflag [#allocation8], 1
    %18 = vsyncpa %s17, 0
    %19 = vsyncpa [#allocation11], 0
    %20 = vsyncpa [#allocation14], 0
    %21 = vsyncpa [#allocation17], 0
    %22 = vsyncpa [#allocation6], 0
    %s23 = scalar_lea.sflag [#allocation6], 1
    %24 = vsyncpa %s23, 0
    loop: start=0, step=1, limit=4
    $region2: #{tpu_custom_call.1} parent=1 // loop_pre_header
      _
    $region3: #{tpu_custom_call.1} parent=1 // loop_header
      %s26 = sphi 0, %s30
      %p27 = scmp.ge.s32.totalorder %s26, 4
      %s33 = sphi 0, %s45
      %s34 = sphi 0, %s41
      %s35 = sphi 0, %s33
      %s36 = sphi 0, %s34
      %s37 = sphi 0, %s35
      %s38 = sphi 0, %s36
      %s48 = sphi 0, %s50
      %s51 = sphi 0, %s48
      %s52 = sphi 0, %s51
      %s68 = sphi 0, %s52
      %s76 = sphi 0, %s78
      %s79 = sphi 0, %s76
      %s80 = sphi 0, %s79
      %s96 = sphi 0, %s80
      %s100 = sphi 0, %s100
      %s102 = sphi 0, %s100
      %s103 = sphi 0, %s102
      %s117 = sphi 0, %s103
      %s121 = sphi 0, %s121
      %s123 = sphi 0, %s121
      %s124 = sphi 0, %s123
      %s138 = sphi 0, %s124
      %s142 = sphi 0, %s142
      %s144 = sphi 0, %s142
      %s145 = sphi 0, %s144
      %s159 = sphi 0, %s145
      %s163 = sphi 0, %s163
      %s165 = sphi 0, %s163
      %s166 = sphi 0, %s165
      %s180 = sphi 0, %s166
      %s184 = sphi 0, %s184
      %s186 = sphi 0, %s184
      %s187 = sphi 0, %s186
      %s201 = sphi 0, %s187
      %s205 = sphi 0, %s205
      %s207 = sphi 0, %s205
      %s208 = sphi 0, %s207
      %s222 = sphi 0, %s208
      %s230 = sphi 0, %s232
      %s233 = sphi 0, %s230
      %s234 = sphi 0, %s233
      %s250 = sphi 0, %s234
    $region4: #{tpu_custom_call.1} parent=1 // loop_header_branch
      %29 = sbr.rel (%p27) target = $region8
    $region5: #{tpu_custom_call.1} parent=1 // loop_body
      %s31 = ssub.s32 %s26, 1
      %s32 = ssub.s32 %s26, 2
      %s39 = sadd.s32 1, %s34
      %p40 = scmp.ge.s32.totalorder %s39, 1
      %s41 = scalar_select %p40, 0, %s39
      %s42 = sadd.s32 1, %s33
      %s43 = scalar_select %p40, %s42, %s33
      %p44 = scmp.ge.s32.totalorder %s43, 2
      %s45 = scalar_select %p44, 0, %s43
      %s46 = ssub.s32 %s33, %s45
      %p47 = scmp.eq.s32.totalorder %s46, 0
      %s49 = sadd.s32 %s48, 1
      %s50 = scalar_select %p47, %s48, %s49
      %p53 = pneg %p47
      %p54 = scmp.eq.s32.totalorder %s26, 1
      %p55 = por %p53, %p54
      %p56 = scmp.ne.s32.totalorder %s48, %s51
      %p57 = scmp.eq.s32.totalorder %s26, 0
      %p58 = por %p56, %p57
      %p59 = scmp.ne.s32.totalorder %s48, %s51
      %p60 = scmp.eq.s32.totalorder %s31, 1
      %p61 = por %p59, %p60
      %p62 = scmp.ne.s32.totalorder %s51, %s52
      %p63 = scmp.eq.s32.totalorder %s31, 0
      %p64 = por %p62, %p63
      %p65 = scmp.ne.s32.totalorder %s51, %s52
      %p66 = scmp.eq.s32.totalorder %s32, 1
      %p67 = por %p65, %p66
      %p69 = scmp.ne.s32.totalorder %s52, %s68
      %p70 = scmp.eq.s32.totalorder %s32, 0
      %p71 = por %p69, %p70
      %s72 = ssub.s32 %s33, %s45
      %s73 = ssub.s32 %s34, %s41
      %s74 = sor.u32 %s72, %s73
      %p75 = scmp.eq.s32.totalorder %s74, 0
      %s77 = sadd.s32 %s76, 1
      %s78 = scalar_select %p75, %s76, %s77
      %p81 = pneg %p75
      %p82 = scmp.eq.s32.totalorder %s26, 1
      %p83 = por %p81, %p82
      %p84 = scmp.ne.s32.totalorder %s76, %s79
      %p85 = scmp.eq.s32.totalorder %s26, 0
      %p86 = por %p84, %p85
      %p87 = scmp.ne.s32.totalorder %s76, %s79
      %p88 = scmp.eq.s32.totalorder %s31, 1
      %p89 = por %p87, %p88
      %p90 = scmp.ne.s32.totalorder %s79, %s80
      %p91 = scmp.eq.s32.totalorder %s31, 0
      %p92 = por %p90, %p91
      %p93 = scmp.ne.s32.totalorder %s79, %s80
      %p94 = scmp.eq.s32.totalorder %s32, 1
      %p95 = por %p93, %p94
      %p97 = scmp.ne.s32.totalorder %s80, %s96
      %p98 = scmp.eq.s32.totalorder %s32, 0
      %p99 = por %p97, %p98
      %s101 = sadd.s32 %s100, 1
      %p104 = scmp.eq.s32.totalorder %s26, 1
      %p105 = scmp.ne.s32.totalorder %s100, %s102
      %p106 = scmp.eq.s32.totalorder %s26, 0
      %p107 = por %p105, %p106
      %p108 = scmp.ne.s32.totalorder %s100, %s102
      %p109 = scmp.eq.s32.totalorder %s31, 1
      %p110 = por %p108, %p109
      %p111 = scmp.ne.s32.totalorder %s102, %s103
      %p112 = scmp.eq.s32.totalorder %s31, 0
      %p113 = por %p111, %p112
      %p114 = scmp.ne.s32.totalorder %s102, %s103
      %p115 = scmp.eq.s32.totalorder %s32, 1
      %p116 = por %p114, %p115
      %p118 = scmp.ne.s32.totalorder %s103, %s117
      %p119 = scmp.eq.s32.totalorder %s32, 0
      %p120 = por %p118, %p119
      %s122 = sadd.s32 %s121, 1
      %p125 = scmp.eq.s32.totalorder %s26, 1
      %p126 = scmp.ne.s32.totalorder %s121, %s123
      %p127 = scmp.eq.s32.totalorder %s26, 0
      %p128 = por %p126, %p127
      %p129 = scmp.ne.s32.totalorder %s121, %s123
      %p130 = scmp.eq.s32.totalorder %s31, 1
      %p131 = por %p129, %p130
      %p132 = scmp.ne.s32.totalorder %s123, %s124
      %p133 = scmp.eq.s32.totalorder %s31, 0
      %p134 = por %p132, %p133
      %p135 = scmp.ne.s32.totalorder %s123, %s124
      %p136 = scmp.eq.s32.totalorder %s32, 1
      %p137 = por %p135, %p136
      %p139 = scmp.ne.s32.totalorder %s124, %s138
      %p140 = scmp.eq.s32.totalorder %s32, 0
      %p141 = por %p139, %p140
      %s143 = sadd.s32 %s142, 1
      %p146 = scmp.eq.s32.totalorder %s26, 1
      %p147 = scmp.ne.s32.totalorder %s142, %s144
      %p148 = scmp.eq.s32.totalorder %s26, 0
      %p149 = por %p147, %p148
      %p150 = scmp.ne.s32.totalorder %s142, %s144
      %p151 = scmp.eq.s32.totalorder %s31, 1
      %p152 = por %p150, %p151
      %p153 = scmp.ne.s32.totalorder %s144, %s145
      %p154 = scmp.eq.s32.totalorder %s31, 0
      %p155 = por %p153, %p154
      %p156 = scmp.ne.s32.totalorder %s144, %s145
      %p157 = scmp.eq.s32.totalorder %s32, 1
      %p158 = por %p156, %p157
      %p160 = scmp.ne.s32.totalorder %s145, %s159
      %p161 = scmp.eq.s32.totalorder %s32, 0
      %p162 = por %p160, %p161
      %s164 = sadd.s32 %s163, 1
      %p167 = scmp.eq.s32.totalorder %s26, 1
      %p168 = scmp.ne.s32.totalorder %s163, %s165
      %p169 = scmp.eq.s32.totalorder %s26, 0
      %p170 = por %p168, %p169
      %p171 = scmp.ne.s32.totalorder %s163, %s165
      %p172 = scmp.eq.s32.totalorder %s31, 1
      %p173 = por %p171, %p172
      %p174 = scmp.ne.s32.totalorder %s165, %s166
      %p175 = scmp.eq.s32.totalorder %s31, 0
      %p176 = por %p174, %p175
      %p177 = scmp.ne.s32.totalorder %s165, %s166
      %p178 = scmp.eq.s32.totalorder %s32, 1
      %p179 = por %p177, %p178
      %p181 = scmp.ne.s32.totalorder %s166, %s180
      %p182 = scmp.eq.s32.totalorder %s32, 0
      %p183 = por %p181, %p182
      %s185 = sadd.s32 %s184, 1
      %p188 = scmp.eq.s32.totalorder %s26, 1
      %p189 = scmp.ne.s32.totalorder %s184, %s186
      %p190 = scmp.eq.s32.totalorder %s26, 0
      %p191 = por %p189, %p190
      %p192 = scmp.ne.s32.totalorder %s184, %s186
      %p193 = scmp.eq.s32.totalorder %s31, 1
      %p194 = por %p192, %p193
      %p195 = scmp.ne.s32.totalorder %s186, %s187
      %p196 = scmp.eq.s32.totalorder %s31, 0
      %p197 = por %p195, %p196
      %p198 = scmp.ne.s32.totalorder %s186, %s187
      %p199 = scmp.eq.s32.totalorder %s32, 1
      %p200 = por %p198, %p199
      %p202 = scmp.ne.s32.totalorder %s187, %s201
      %p203 = scmp.eq.s32.totalorder %s32, 0
      %p204 = por %p202, %p203
      %s206 = sadd.s32 %s205, 1
      %p209 = scmp.eq.s32.totalorder %s26, 1
      %p210 = scmp.ne.s32.totalorder %s205, %s207
      %p211 = scmp.eq.s32.totalorder %s26, 0
      %p212 = por %p210, %p211
      %p213 = scmp.ne.s32.totalorder %s205, %s207
      %p214 = scmp.eq.s32.totalorder %s31, 1
      %p215 = por %p213, %p214
      %p216 = scmp.ne.s32.totalorder %s207, %s208
      %p217 = scmp.eq.s32.totalorder %s31, 0
      %p218 = por %p216, %p217
      %p219 = scmp.ne.s32.totalorder %s207, %s208
      %p220 = scmp.eq.s32.totalorder %s32, 1
      %p221 = por %p219, %p220
      %p223 = scmp.ne.s32.totalorder %s208, %s222
      %p224 = scmp.eq.s32.totalorder %s32, 0
      %p225 = por %p223, %p224
      %s226 = ssub.s32 %s33, %s45
      %s227 = ssub.s32 %s34, %s41
      %s228 = sor.u32 %s226, %s227
      %p229 = scmp.eq.s32.totalorder %s228, 0
      %s231 = sadd.s32 %s230, 1
      %s232 = scalar_select %p229, %s230, %s231
      %p235 = pneg %p229
      %p236 = scmp.eq.s32.totalorder %s26, 1
      %p237 = por %p235, %p236
      %p238 = scmp.ne.s32.totalorder %s230, %s233
      %p239 = scmp.eq.s32.totalorder %s26, 0
      %p240 = por %p238, %p239
      %p241 = scmp.ne.s32.totalorder %s230, %s233
      %p242 = scmp.eq.s32.totalorder %s31, 1
      %p243 = por %p241, %p242
      %p244 = scmp.ne.s32.totalorder %s233, %s234
      %p245 = scmp.eq.s32.totalorder %s31, 0
      %p246 = por %p244, %p245
      %p247 = scmp.ne.s32.totalorder %s233, %s234
      %p248 = scmp.eq.s32.totalorder %s32, 1
      %p249 = por %p247, %p248
      %p251 = scmp.ne.s32.totalorder %s234, %s250
      %p252 = scmp.eq.s32.totalorder %s32, 0
      %p253 = por %p251, %p252
      %p254 = scmp.le.s32.totalorder 1, %s26
      %p255 = scmp.lt.s32.totalorder %s26, 3
      %p256 = pnand %p254, %p255
      %p257 = pneg %p256
      // Predicated region
      $region9: #{tpu_custom_call.1} parent=5 // pred_check
        _
      $region10: #{tpu_custom_call.1} parent=5 // pred_check_branch
        %259 = sbr.rel (%p256) target = $region12
      $region11: #{tpu_custom_call.1} parent=5 // pred_region
        %s260 = ssub.s32 %s26, 1
        // Predicated region
        $region13: #{tpu_custom_call.1} parent=11 // pred_check
          %p261 = pneg %p113
        $region14: #{tpu_custom_call.1} parent=11 // pred_check_branch
          %263 = sbr.rel (%p261) target = $region16
        $region15: #{tpu_custom_call.1} parent=11 // pred_region
          %s265 = ssub.s32 512, 512
          %266 = vsyncadd [#allocation8], %s265
          %s267 = sshll.u32 [#allocation9], 4
          %s268 = int_to_ptr.vmem [resolvable:$true] %s267
          %273 = dma.hbm_to_vmem [thread:$0]  %s2, 512, %s268, [#allocation8], 128, 128, 8
        $region16: #{tpu_custom_call.1} parent=11 // pred_fallthru
          _
        // Predicated region
        $region17: #{tpu_custom_call.1} parent=11 // pred_check
          %p274 = pneg %p134
        $region18: #{tpu_custom_call.1} parent=11 // pred_check_branch
          %276 = sbr.rel (%p274) target = $region20
        $region19: #{tpu_custom_call.1} parent=11 // pred_region
          %s278 = ssub.s32 16, 16
          %279 = vsyncadd [#allocation11], %s278
          %s281 = sshll.u32 [#allocation10], 4
          %s282 = int_to_ptr.vmem [resolvable:$true] %s281
          %284 = dma.hbm_to_vmem [thread:$0]  %s3, 16, %s282, [#allocation11]
        $region20: #{tpu_custom_call.1} parent=11 // pred_fallthru
          _
        // Predicated region
        $region21: #{tpu_custom_call.1} parent=11 // pred_check
          %p285 = pneg %p155
        $region22: #{tpu_custom_call.1} parent=11 // pred_check_branch
          %287 = sbr.rel (%p285) target = $region24
        $region23: #{tpu_custom_call.1} parent=11 // pred_region
          %s289 = ssub.s32 512, 512
          %290 = vsyncadd [#allocation11], %s289
          %s291 = sshll.u32 [#allocation12], 4
          %s292 = int_to_ptr.vmem [resolvable:$true] %s291
          %297 = dma.hbm_to_vmem [thread:$0]  %s4, 512, %s292, [#allocation11], 128, 128, 8
        $region24: #{tpu_custom_call.1} parent=11 // pred_fallthru
          _
        // Predicated region
        $region25: #{tpu_custom_call.1} parent=11 // pred_check
          %p298 = pneg %p176
        $region26: #{tpu_custom_call.1} parent=11 // pred_check_branch
          %300 = sbr.rel (%p298) target = $region28
        $region27: #{tpu_custom_call.1} parent=11 // pred_region
          %s302 = ssub.s32 16, 16
          %303 = vsyncadd [#allocation14], %s302
          %s305 = sshll.u32 [#allocation13], 4
          %s306 = int_to_ptr.vmem [resolvable:$true] %s305
          %308 = dma.hbm_to_vmem [thread:$0]  %s5, 16, %s306, [#allocation14]
        $region28: #{tpu_custom_call.1} parent=11 // pred_fallthru
          _
        // Predicated region
        $region29: #{tpu_custom_call.1} parent=11 // pred_check
          %p309 = pneg %p197
        $region30: #{tpu_custom_call.1} parent=11 // pred_check_branch
          %311 = sbr.rel (%p309) target = $region32
        $region31: #{tpu_custom_call.1} parent=11 // pred_region
          %s313 = ssub.s32 512, 512
          %314 = vsyncadd [#allocation14], %s313
          %s315 = sshll.u32 [#allocation15], 4
          %s316 = int_to_ptr.vmem [resolvable:$true] %s315
          %321 = dma.hbm_to_vmem [thread:$0]  %s6, 512, %s316, [#allocation14], 128, 128, 8
        $region32: #{tpu_custom_call.1} parent=11 // pred_fallthru
          _
        // Predicated region
        $region33: #{tpu_custom_call.1} parent=11 // pred_check
          %p322 = pneg %p218
        $region34: #{tpu_custom_call.1} parent=11 // pred_check_branch
          %324 = sbr.rel (%p322) target = $region36
        $region35: #{tpu_custom_call.1} parent=11 // pred_region
          %s326 = ssub.s32 16, 16
          %327 = vsyncadd [#allocation17], %s326
          %s329 = sshll.u32 [#allocation16], 4
          %s330 = int_to_ptr.vmem [resolvable:$true] %s329
          %332 = dma.hbm_to_vmem [thread:$0]  %s7, 16, %s330, [#allocation17]
        $region36: #{tpu_custom_call.1} parent=11 // pred_fallthru
          _
      $region12: #{tpu_custom_call.1} parent=5 // pred_fallthru
        _
      %p333 = scmp.lt.s32.totalorder %s26, 2
      // Predicated region
      $region37: #{tpu_custom_call.1} parent=5 // pred_check
        %p334 = pneg %p333
      $region38: #{tpu_custom_call.1} parent=5 // pred_check_branch
        %336 = sbr.rel (%p334) target = $region40
      $region39: #{tpu_custom_call.1} parent=5 // pred_region
        // Predicated region
        $region41: #{tpu_custom_call.1} parent=39 // pred_check
          %p337 = pneg %p58
        $region42: #{tpu_custom_call.1} parent=39 // pred_check_branch
          %339 = sbr.rel (%p337) target = $region44
        $region43: #{tpu_custom_call.1} parent=39 // pred_region
          %s340 = sand.u32 %s48, 1
          %s341 = scalar_lea.sflag [#allocation5], %s340
          %s342 = sand.u32 %s48, 1
          %s343 = smul.addr %s342, 8
          %s344 = scalar_lea.vmem [#allocation4], %s343
          %s346 = ssub.s32 128, 128
          %347 = vsyncadd %s341, %s346
          %s348 = smul.addr %s33, 128
          %s349 = scalar_lea.hbm %s0, %s348
          %s351 = sshll.u32 %s344, 4
          %s352 = int_to_ptr.vmem [resolvable:$true] %s351
          %354 = dma.hbm_to_vmem [thread:$0]  %s349, 128, %s352, %s341
        $region44: #{tpu_custom_call.1} parent=39 // pred_fallthru
          _
        // Predicated region
        $region45: #{tpu_custom_call.1} parent=39 // pred_check
          %p355 = pneg %p86
        $region46: #{tpu_custom_call.1} parent=39 // pred_check_branch
          %357 = sbr.rel (%p355) target = $region48
        $region47: #{tpu_custom_call.1} parent=39 // pred_region
          %s358 = sand.u32 %s26, 1
          %s359 = scalar_lea.sflag [#allocation8], %s358
          %s360 = sand.u32 %s76, 1
          %s361 = smul.addr %s360, 4
          %s362 = scalar_lea.vmem [#allocation7], %s361
          %s364 = ssub.s32 64, 64
          %365 = vsyncadd %s359, %s364
          %s366 = sadd.s32 %s34, %s33
          %s367 = smul.addr %s366, 64
          %s368 = scalar_lea.hbm %s1, %s367
          %s370 = sshll.u32 %s362, 4
          %s371 = int_to_ptr.vmem [resolvable:$true] %s370
          %373 = dma.hbm_to_vmem [thread:$0]  %s368, 64, %s371, %s359
        $region48: #{tpu_custom_call.1} parent=39 // pred_fallthru
          _
      $region40: #{tpu_custom_call.1} parent=5 // pred_fallthru
        _
      %p374 = scmp.le.s32.totalorder 1, %s26
      %p375 = scmp.lt.s32.totalorder %s26, 3
      %p376 = pnand %p374, %p375
      %p377 = pneg %p376
      // Predicated region
      $region49: #{tpu_custom_call.1} parent=5 // pred_check
        _
      $region50: #{tpu_custom_call.1} parent=5 // pred_check_branch
        %379 = sbr.rel (%p376) target = $region52
      $region51: #{tpu_custom_call.1} parent=5 // pred_region
        %s380 = ssub.s32 %s26, 1
        %s381 = sand.u32 %s51, 1
        %s382 = scalar_lea.sflag [#allocation5], %s381
        %s383 = sand.u32 %s51, 1
        %s384 = smul.addr %s383, 8
        %s385 = scalar_lea.vmem [#allocation4], %s384
        // Predicated region
        $region53: #{tpu_custom_call.1} parent=51 // pred_check
          %p386 = pneg %p64
        $region54: #{tpu_custom_call.1} parent=51 // pred_check_branch
          %388 = sbr.rel (%p386) target = $region56
        $region55: #{tpu_custom_call.1} parent=51 // pred_region
          %389 = dma.done %s382, 128
        $region56: #{tpu_custom_call.1} parent=51 // pred_fallthru
          _
        %s390 = sand.u32 %s31, 1
        %s391 = scalar_lea.sflag [#allocation8], %s390
        %s392 = sand.u32 %s79, 1
        %s393 = smul.addr %s392, 4
        %s394 = scalar_lea.vmem [#allocation7], %s393
        // Predicated region
        $region57: #{tpu_custom_call.1} parent=51 // pred_check
          %p395 = pneg %p92
        $region58: #{tpu_custom_call.1} parent=51 // pred_check_branch
          %397 = sbr.rel (%p395) target = $region60
        $region59: #{tpu_custom_call.1} parent=51 // pred_region
          %398 = dma.done %s391, 64
        $region60: #{tpu_custom_call.1} parent=51 // pred_fallthru
          _
        // Predicated region
        $region61: #{tpu_custom_call.1} parent=51 // pred_check
          %p399 = pneg %p113
        $region62: #{tpu_custom_call.1} parent=51 // pred_check_branch
          %401 = sbr.rel (%p399) target = $region64
        $region63: #{tpu_custom_call.1} parent=51 // pred_region
          %402 = dma.done [#allocation8], 512
        $region64: #{tpu_custom_call.1} parent=51 // pred_fallthru
          _
        // Predicated region
        $region65: #{tpu_custom_call.1} parent=51 // pred_check
          %p403 = pneg %p134
        $region66: #{tpu_custom_call.1} parent=51 // pred_check_branch
          %405 = sbr.rel (%p403) target = $region68
        $region67: #{tpu_custom_call.1} parent=51 // pred_region
          %406 = dma.done [#allocation11], 16
        $region68: #{tpu_custom_call.1} parent=51 // pred_fallthru
          _
        // Predicated region
        $region69: #{tpu_custom_call.1} parent=51 // pred_check
          %p407 = pneg %p155
        $region70: #{tpu_custom_call.1} parent=51 // pred_check_branch
          %409 = sbr.rel (%p407) target = $region72
        $region71: #{tpu_custom_call.1} parent=51 // pred_region
          %410 = dma.done [#allocation11], 512
        $region72: #{tpu_custom_call.1} parent=51 // pred_fallthru
          _
        // Predicated region
        $region73: #{tpu_custom_call.1} parent=51 // pred_check
          %p411 = pneg %p176
        $region74: #{tpu_custom_call.1} parent=51 // pred_check_branch
          %413 = sbr.rel (%p411) target = $region76
        $region75: #{tpu_custom_call.1} parent=51 // pred_region
          %414 = dma.done [#allocation14], 16
        $region76: #{tpu_custom_call.1} parent=51 // pred_fallthru
          _
        // Predicated region
        $region77: #{tpu_custom_call.1} parent=51 // pred_check
          %p415 = pneg %p197
        $region78: #{tpu_custom_call.1} parent=51 // pred_check_branch
          %417 = sbr.rel (%p415) target = $region80
        $region79: #{tpu_custom_call.1} parent=51 // pred_region
          %418 = dma.done [#allocation14], 512
        $region80: #{tpu_custom_call.1} parent=51 // pred_fallthru
          _
        // Predicated region
        $region81: #{tpu_custom_call.1} parent=51 // pred_check
          %p419 = pneg %p218
        $region82: #{tpu_custom_call.1} parent=51 // pred_check_branch
          %421 = sbr.rel (%p419) target = $region84
        $region83: #{tpu_custom_call.1} parent=51 // pred_region
          %422 = dma.done [#allocation17], 16
        $region84: #{tpu_custom_call.1} parent=51 // pred_fallthru
          _
        %s423 = sand.u32 %s51, 1
        %s424 = scalar_lea.sflag [#allocation5], %s423
        %s425 = sand.u32 %s51, 1
        %s426 = smul.addr %s425, 8
        %s427 = scalar_lea.vmem [#allocation4], %s426
        %p428 = pneg %p64
        %p429 = pneg %p61
        %s430 = sand.u32 %s31, 1
        %s431 = scalar_lea.sflag [#allocation8], %s430
        %s432 = sand.u32 %s79, 1
        %s433 = smul.addr %s432, 4
        %s434 = scalar_lea.vmem [#allocation7], %s433
        %p435 = pneg %p92
        %p436 = pneg %p89
        %p437 = pneg %p113
        %p438 = pneg %p110
        %p439 = pneg %p134
        %p440 = pneg %p131
        %p441 = pneg %p155
        %p442 = pneg %p152
        %p443 = pneg %p176
        %p444 = pneg %p173
        %p445 = pneg %p197
        %p446 = pneg %p194
        %p447 = pneg %p218
        %p448 = pneg %p215
        %p449 = pneg %p246
        %p450 = pneg %p243
        %s451 = sand.u32 %s233, 1
        %s452 = scalar_lea.sflag [#allocation6], %s451
        %s453 = sand.u32 %s233, 1
        %s454 = smul.addr %s453, 8
        %s455 = scalar_lea.vmem [#allocation18], %s454
        %p456 = scmp.eq.s32.totalorder %s36, 0
        // Predicated region
        $region85: #{tpu_custom_call.1} parent=51 // pred_check
          %p457 = pneg %p456
        $region86: #{tpu_custom_call.1} parent=51 // pred_check_branch
          %459 = sbr.rel (%p457) target = $region88
        $region87: #{tpu_custom_call.1} parent=51 // pred_region
          %v460 = vld [vmem:[%s385] sm:$0xff]
          %v461 = vld [vmem:[#allocation12] sm:$0xff]
          %v462 = vld [vmem:[#allocation12 + $0x8] sm:$0xff]
          %v463 = vld [vmem:[#allocation12 + $0x10] sm:$0xff]
          %v464 = vld [vmem:[#allocation12 + $0x18] sm:$0xff]
          %v465 = vld [vmem:[#allocation13] sm:$0x1]
          %v467 = vlaneseq
          %v468 = vshrl.u32 %v467, 7
          %v469 = vsub.s32 0, %v468
          %v470 = vrot.slane %v465, %v469
          %vm472 = vcmask 261120
          %v474 = vsel %vm472, %v460, 0
          %476 = vmatprep.subr.mxu0 0.0
          %477 = vmatpush1.msra.mxu0 %v461
          %478 = vmatprep.subr.mxu0 0.0
          %479 = vmatpush1.msra.mxu0 %v462
          %480 = vmatprep.subr.mxu0 0.0
          %481 = vmatpush1.msra.mxu0 %v463
          %482 = vmatprep.subr.mxu0 0.0
          %483 = vmatpush1.msra.mxu0 %v464
          %484 = vmatprep.subr.mxu0 0.0
          %485 = vmatpush1.msra.mxu0 0.0
          %486 = vmatprep.subr.mxu0 0.0
          %487 = vmatpush1.msra.mxu0 0.0
          %488 = vmatprep.subr.mxu0 0.0
          %489 = vmatpush1.msra.mxu0 0.0
          %490 = vmatprep.subr.mxu0 0.0
          %491 = vmatpush1.msra.mxu0 0.0
          %492 = vmatprep.subr.mxu0 0.0
          %493 = vmatpush1.msra.mxu0 0.0
          %494 = vmatprep.subr.mxu0 0.0
          %495 = vmatpush1.msra.mxu0 0.0
          %496 = vmatprep.subr.mxu0 0.0
          %497 = vmatpush1.msra.mxu0 0.0
          %498 = vmatprep.subr.mxu0 0.0
          %499 = vmatpush1.msra.mxu0 0.0
          %500 = vmatprep.subr.mxu0 0.0
          %501 = vmatpush1.msra.mxu0 0.0
          %502 = vmatprep.subr.mxu0 0.0
          %503 = vmatpush1.msra.mxu0 0.0
          %504 = vmatprep.subr.mxu0 0.0
          %505 = vmatpush1.msra.mxu0 0.0
          %506 = vmatprep.subr.mxu0 0.0
          %507 = vmatpush1.msra.mxu0 0.0
          %508 = vmatprep.subr.mxu0 0.0
          %509 = vmatpush1.msra.mxu0 0.0
          %510 = vmatprep.subr.mxu0 0.0
          %511 = vmatpush1.msra.mxu0 0.0
          %512 = vmatprep.subr.mxu0 0.0
          %513 = vmatpush1.msra.mxu0 0.0
          %514 = vmatprep.subr.mxu0 0.0
          %515 = vmatpush1.msra.mxu0 0.0
          %516 = vmatprep.subr.mxu0 0.0
          %517 = vmatpush1.msra.mxu0 0.0
          %518 = vmatprep.subr.mxu0 0.0
          %519 = vmatpush1.msra.mxu0 0.0
          %520 = vmatprep.subr.mxu0 0.0
          %521 = vmatpush1.msra.mxu0 0.0
          %522 = vmatprep.subr.mxu0 0.0
          %523 = vmatpush1.msra.mxu0 0.0
          %524 = vmatprep.subr.mxu0 0.0
          %525 = vmatpush1.msra.mxu0 0.0
          %526 = vmatprep.subr.mxu0 0.0
          %527 = vmatpush1.msra.mxu0 0.0
          %528 = vmatprep.subr.mxu0 0.0
          %529 = vmatpush1.msra.mxu0 0.0
          %530 = vmatprep.subr.mxu0 0.0
          %531 = vmatpush1.msra.mxu0 0.0
          %532 = vmatprep.subr.mxu0 0.0
          %533 = vmatpush1.msra.mxu0 0.0
          %534 = vmatprep.subr.mxu0 0.0
          %535 = vmatpush1.msra.mxu0 0.0
          %536 = vmatprep.subr.mxu0 0.0
          %537 = vmatpush1.msra.mxu0 0.0
          %538 = vmatprep.subr.mxu0 0.0
          %539 = vmatpush1.msra.mxu0 0.0
          %540 = vmatprep.mubr.f32.mxu0 0.0
          %541 = vmatmul.mubr.f32.gmra.mrb[0].mxu0 %v474
          %v542 = vpop.f32.mrb[0].mxu0
          %v543 = vadd.f32 %v470, %v542
          %v544 = vpop.f32.mrb[0].mxu0
          %545 = vdwg.mxu0
          %546 = vxpose.xlu0.b32.start [1/16] %v543, 128
          %547 = vxpose.xlu0.b32.cont [2/16] 0.0, 128
          %548 = vxpose.xlu0.b32.cont [3/16] 0.0, 128
          %549 = vxpose.xlu0.b32.cont [4/16] 0.0, 128
          %550 = vxpose.xlu0.b32.cont [5/16] 0.0, 128
          %551 = vxpose.xlu0.b32.cont [6/16] 0.0, 128
          %552 = vxpose.xlu0.b32.cont [7/16] 0.0, 128
          %553 = vxpose.xlu0.b32.cont [8/16] 0.0, 128
          %554 = vxpose.xlu0.b32.cont [9/16] 0.0, 128
          %555 = vxpose.xlu0.b32.cont [10/16] 0.0, 128
          %556 = vxpose.xlu0.b32.cont [11/16] 0.0, 128
          %557 = vxpose.xlu0.b32.cont [12/16] 0.0, 128
          %558 = vxpose.xlu0.b32.cont [13/16] 0.0, 128
          %559 = vxpose.xlu0.b32.cont [14/16] 0.0, 128
          %560 = vxpose.xlu0.b32.cont [15/16] 0.0, 128
          %561 = vxpose.xlu0.b32.end [16/16] 0.0, 128
          %v562 = vpop.trf.xlu0
          %v563 = vpop.trf.xlu0
          %v564 = vpop.trf.xlu0
          %v565 = vpop.trf.xlu0
          %v566 = vpop.trf.xlu0
          %v567 = vpop.trf.xlu0
          %v568 = vpop.trf.xlu0
          %v569 = vpop.trf.xlu0
          %v570 = vpop.trf.xlu0
          %v571 = vpop.trf.xlu0
          %v572 = vpop.trf.xlu0
          %v573 = vpop.trf.xlu0
          %v574 = vpop.trf.xlu0
          %v575 = vpop.trf.xlu0
          %v576 = vpop.trf.xlu0
          %v577 = vpop.trf.xlu0
          %vm578 = vcmask 64512
          %579 = vst.msk [vmem:[#allocation2] sm:$0xff] %vm578, %v562
          %580 = vst.msk [vmem:[#allocation2 + $0x8] sm:$0xff] %vm578, %v563
          %581 = vst.msk [vmem:[#allocation2 + $0x10] sm:$0xff] %vm578, %v564
          %582 = vst.msk [vmem:[#allocation2 + $0x18] sm:$0xff] %vm578, %v565
          %583 = vxpose.xlu0.b32.start [1/16] %v566, 128
          %584 = vxpose.xlu0.b32.cont [2/16] 0.0, 128
          %585 = vxpose.xlu0.b32.cont [3/16] 0.0, 128
          %586 = vxpose.xlu0.b32.cont [4/16] 0.0, 128
          %587 = vxpose.xlu0.b32.cont [5/16] 0.0, 128
          %588 = vxpose.xlu0.b32.cont [6/16] 0.0, 128
          %589 = vxpose.xlu0.b32.cont [7/16] 0.0, 128
          %590 = vxpose.xlu0.b32.cont [8/16] 0.0, 128
          %591 = vxpose.xlu0.b32.cont [9/16] 0.0, 128
          %592 = vxpose.xlu0.b32.cont [10/16] 0.0, 128
          %593 = vxpose.xlu0.b32.cont [11/16] 0.0, 128
          %594 = vxpose.xlu0.b32.cont [12/16] 0.0, 128
          %595 = vxpose.xlu0.b32.cont [13/16] 0.0, 128
          %596 = vxpose.xlu0.b32.cont [14/16] 0.0, 128
          %597 = vxpose.xlu0.b32.cont [15/16] 0.0, 128
          %598 = vxpose.xlu0.b32.end [16/16] 0.0, 128
          %v599 = vpop.trf.xlu0
          %v600 = vpop.trf.xlu0
          %v601 = vpop.trf.xlu0
          %v602 = vpop.trf.xlu0
          %v603 = vpop.trf.xlu0
          %v604 = vpop.trf.xlu0
          %v605 = vpop.trf.xlu0
          %v606 = vpop.trf.xlu0
          %v607 = vpop.trf.xlu0
          %v608 = vpop.trf.xlu0
          %v609 = vpop.trf.xlu0
          %v610 = vpop.trf.xlu0
          %v611 = vpop.trf.xlu0
          %v612 = vpop.trf.xlu0
          %v613 = vpop.trf.xlu0
          %v614 = vpop.trf.xlu0
          %615 = vxpose.xlu0.b32.start [1/16] %v567, 128
          %616 = vxpose.xlu0.b32.cont [2/16] 0.0, 128
          %617 = vxpose.xlu0.b32.cont [3/16] 0.0, 128
          %618 = vxpose.xlu0.b32.cont [4/16] 0.0, 128
          %619 = vxpose.xlu0.b32.cont [5/16] 0.0, 128
          %620 = vxpose.xlu0.b32.cont [6/16] 0.0, 128
          %621 = vxpose.xlu0.b32.cont [7/16] 0.0, 128
          %622 = vxpose.xlu0.b32.cont [8/16] 0.0, 128
          %623 = vxpose.xlu0.b32.cont [9/16] 0.0, 128
          %624 = vxpose.xlu0.b32.cont [10/16] 0.0, 128
          %625 = vxpose.xlu0.b32.cont [11/16] 0.0, 128
          %626 = vxpose.xlu0.b32.cont [12/16] 0.0, 128
          %627 = vxpose.xlu0.b32.cont [13/16] 0.0, 128
          %628 = vxpose.xlu0.b32.cont [14/16] 0.0, 128
          %629 = vxpose.xlu0.b32.cont [15/16] 0.0, 128
          %630 = vxpose.xlu0.b32.end [16/16] 0.0, 128
          %v631 = vpop.trf.xlu0
          %v632 = vpop.trf.xlu0
          %v633 = vpop.trf.xlu0
          %v634 = vpop.trf.xlu0
          %v635 = vpop.trf.xlu0
          %v636 = vpop.trf.xlu0
          %v637 = vpop.trf.xlu0
          %v638 = vpop.trf.xlu0
          %v639 = vpop.trf.xlu0
          %v640 = vpop.trf.xlu0
          %v641 = vpop.trf.xlu0
          %v642 = vpop.trf.xlu0
          %v643 = vpop.trf.xlu0
          %v644 = vpop.trf.xlu0
          %v645 = vpop.trf.xlu0
          %v646 = vpop.trf.xlu0
          %647 = vxpose.xlu0.b32.start [1/16] %v568, 128
          %648 = vxpose.xlu0.b32.cont [2/16] 0.0, 128
          %649 = vxpose.xlu0.b32.cont [3/16] 0.0, 128
          %650 = vxpose.xlu0.b32.cont [4/16] 0.0, 128
          %651 = vxpose.xlu0.b32.cont [5/16] 0.0, 128
          %652 = vxpose.xlu0.b32.cont [6/16] 0.0, 128
          %653 = vxpose.xlu0.b32.cont [7/16] 0.0, 128
          %654 = vxpose.xlu0.b32.cont [8/16] 0.0, 128
          %655 = vxpose.xlu0.b32.cont [9/16] 0.0, 128
          %656 = vxpose.xlu0.b32.cont [10/16] 0.0, 128
          %657 = vxpose.xlu0.b32.cont [11/16] 0.0, 128
          %658 = vxpose.xlu0.b32.cont [12/16] 0.0, 128
          %659 = vxpose.xlu0.b32.cont [13/16] 0.0, 128
          %660 = vxpose.xlu0.b32.cont [14/16] 0.0, 128
          %661 = vxpose.xlu0.b32.cont [15/16] 0.0, 128
          %662 = vxpose.xlu0.b32.end [16/16] 0.0, 128
          %v663 = vpop.trf.xlu0
          %v664 = vpop.trf.xlu0
          %v665 = vpop.trf.xlu0
          %v666 = vpop.trf.xlu0
          %v667 = vpop.trf.xlu0
          %v668 = vpop.trf.xlu0
          %v669 = vpop.trf.xlu0
          %v670 = vpop.trf.xlu0
          %v671 = vpop.trf.xlu0
          %v672 = vpop.trf.xlu0
          %v673 = vpop.trf.xlu0
          %v674 = vpop.trf.xlu0
          %v675 = vpop.trf.xlu0
          %v676 = vpop.trf.xlu0
          %v677 = vpop.trf.xlu0
          %v678 = vpop.trf.xlu0
          %679 = vxpose.xlu0.b32.start [1/16] %v569, 128
          %680 = vxpose.xlu0.b32.cont [2/16] 0.0, 128
          %681 = vxpose.xlu0.b32.cont [3/16] 0.0, 128
          %682 = vxpose.xlu0.b32.cont [4/16] 0.0, 128
          %683 = vxpose.xlu0.b32.cont [5/16] 0.0, 128
          %684 = vxpose.xlu0.b32.cont [6/16] 0.0, 128
          %685 = vxpose.xlu0.b32.cont [7/16] 0.0, 128
          %686 = vxpose.xlu0.b32.cont [8/16] 0.0, 128
          %687 = vxpose.xlu0.b32.cont [9/16] 0.0, 128
          %688 = vxpose.xlu0.b32.cont [10/16] 0.0, 128
          %689 = vxpose.xlu0.b32.cont [11/16] 0.0, 128
          %690 = vxpose.xlu0.b32.cont [12/16] 0.0, 128
          %691 = vxpose.xlu0.b32.cont [13/16] 0.0, 128
          %692 = vxpose.xlu0.b32.cont [14/16] 0.0, 128
          %693 = vxpose.xlu0.b32.cont [15/16] 0.0, 128
          %694 = vxpose.xlu0.b32.end [16/16] 0.0, 128
          %v695 = vpop.trf.xlu0
          %v696 = vpop.trf.xlu0
          %v697 = vpop.trf.xlu0
          %v698 = vpop.trf.xlu0
          %v699 = vpop.trf.xlu0
          %v700 = vpop.trf.xlu0
          %v701 = vpop.trf.xlu0
          %v702 = vpop.trf.xlu0
          %v703 = vpop.trf.xlu0
          %v704 = vpop.trf.xlu0
          %v705 = vpop.trf.xlu0
          %v706 = vpop.trf.xlu0
          %v707 = vpop.trf.xlu0
          %v708 = vpop.trf.xlu0
          %v709 = vpop.trf.xlu0
          %v710 = vpop.trf.xlu0
          %711 = vst.msk [vmem:[#allocation3] sm:$0xff] %vm578, %v599
          %712 = vst.msk [vmem:[#allocation3 + $0x8] sm:$0xff] %vm578, %v631
          %713 = vst.msk [vmem:[#allocation3 + $0x10] sm:$0xff] %vm578, %v663
          %714 = vst.msk [vmem:[#allocation3 + $0x18] sm:$0xff] %vm578, %v695
        $region88: #{tpu_custom_call.1} parent=51 // pred_fallthru
          _
        %s715 = smul.u32 %s36, 8
        %s716 = scalar_lea.vmem %s385, %s715 [#allocation4]
        %v717 = vld [vmem:[%s716] sm:$0xff]
        %v718 = vld [vmem:[#allocation9] sm:$0xff]
        %v719 = vld [vmem:[#allocation9 + $0x8] sm:$0xff]
        %v720 = vld [vmem:[#allocation9 + $0x10] sm:$0xff]
        %v721 = vld [vmem:[#allocation9 + $0x18] sm:$0xff]
        %v722 = vld [vmem:[#allocation10] sm:$0x1]
        %v724 = vlaneseq
        %v725 = vshrl.u32 %v724, 7
        %v726 = vsub.s32 0, %v725
        %v727 = vrot.slane %v722, %v726
        %vm729 = vcmask 261120
        %v731 = vsel %vm729, %v717, 0
        %733 = vmatprep.subr.mxu0 0.0
        %734 = vmatpush1.msra.mxu0 %v718
        %735 = vmatprep.subr.mxu0 0.0
        %736 = vmatpush1.msra.mxu0 %v719
        %737 = vmatprep.subr.mxu0 0.0
        %738 = vmatpush1.msra.mxu0 %v720
        %739 = vmatprep.subr.mxu0 0.0
        %740 = vmatpush1.msra.mxu0 %v721
        %741 = vmatprep.subr.mxu0 0.0
        %742 = vmatpush1.msra.mxu0 0.0
        %743 = vmatprep.subr.mxu0 0.0
        %744 = vmatpush1.msra.mxu0 0.0
        %745 = vmatprep.subr.mxu0 0.0
        %746 = vmatpush1.msra.mxu0 0.0
        %747 = vmatprep.subr.mxu0 0.0
        %748 = vmatpush1.msra.mxu0 0.0
        %749 = vmatprep.subr.mxu0 0.0
        %750 = vmatpush1.msra.mxu0 0.0
        %751 = vmatprep.subr.mxu0 0.0
        %752 = vmatpush1.msra.mxu0 0.0
        %753 = vmatprep.subr.mxu0 0.0
        %754 = vmatpush1.msra.mxu0 0.0
        %755 = vmatprep.subr.mxu0 0.0
        %756 = vmatpush1.msra.mxu0 0.0
        %757 = vmatprep.subr.mxu0 0.0
        %758 = vmatpush1.msra.mxu0 0.0
        %759 = vmatprep.subr.mxu0 0.0
        %760 = vmatpush1.msra.mxu0 0.0
        %761 = vmatprep.subr.mxu0 0.0
        %762 = vmatpush1.msra.mxu0 0.0
        %763 = vmatprep.subr.mxu0 0.0
        %764 = vmatpush1.msra.mxu0 0.0
        %765 = vmatprep.subr.mxu0 0.0
        %766 = vmatpush1.msra.mxu0 0.0
        %767 = vmatprep.subr.mxu0 0.0
        %768 = vmatpush1.msra.mxu0 0.0
        %769 = vmatprep.subr.mxu0 0.0
        %770 = vmatpush1.msra.mxu0 0.0
        %771 = vmatprep.subr.mxu0 0.0
        %772 = vmatpush1.msra.mxu0 0.0
        %773 = vmatprep.subr.mxu0 0.0
        %774 = vmatpush1.msra.mxu0 0.0
        %775 = vmatprep.subr.mxu0 0.0
        %776 = vmatpush1.msra.mxu0 0.0
        %777 = vmatprep.subr.mxu0 0.0
        %778 = vmatpush1.msra.mxu0 0.0
        %779 = vmatprep.subr.mxu0 0.0
        %780 = vmatpush1.msra.mxu0 0.0
        %781 = vmatprep.subr.mxu0 0.0
        %782 = vmatpush1.msra.mxu0 0.0
        %783 = vmatprep.subr.mxu0 0.0
        %784 = vmatpush1.msra.mxu0 0.0
        %785 = vmatprep.subr.mxu0 0.0
        %786 = vmatpush1.msra.mxu0 0.0
        %787 = vmatprep.subr.mxu0 0.0
        %788 = vmatpush1.msra.mxu0 0.0
        %789 = vmatprep.subr.mxu0 0.0
        %790 = vmatpush1.msra.mxu0 0.0
        %791 = vmatprep.subr.mxu0 0.0
        %792 = vmatpush1.msra.mxu0 0.0
        %793 = vmatprep.subr.mxu0 0.0
        %794 = vmatpush1.msra.mxu0 0.0
        %795 = vmatprep.subr.mxu0 0.0
        %796 = vmatpush1.msra.mxu0 0.0
        %797 = vmatprep.mubr.f32.mxu0 0.0
        %798 = vmatmul.mubr.f32.gmra.mrb[0].mxu0 %v731
        %v799 = vpop.f32.mrb[0].mxu0
        %v800 = vadd.f32 %v727, %v799
        %v801 = vpop.f32.mrb[0].mxu0
        %802 = vdwg.mxu0
        %v803 = vmul.f32 %v800, 0.35355338
        %804 = vxpose.xlu0.b32.start [1/16] %v803, 128
        %805 = vxpose.xlu0.b32.cont [2/16] 0.0, 128
        %806 = vxpose.xlu0.b32.cont [3/16] 0.0, 128
        %807 = vxpose.xlu0.b32.cont [4/16] 0.0, 128
        %808 = vxpose.xlu0.b32.cont [5/16] 0.0, 128
        %809 = vxpose.xlu0.b32.cont [6/16] 0.0, 128
        %810 = vxpose.xlu0.b32.cont [7/16] 0.0, 128
        %811 = vxpose.xlu0.b32.cont [8/16] 0.0, 128
        %812 = vxpose.xlu0.b32.cont [9/16] 0.0, 128
        %813 = vxpose.xlu0.b32.cont [10/16] 0.0, 128
        %814 = vxpose.xlu0.b32.cont [11/16] 0.0, 128
        %815 = vxpose.xlu0.b32.cont [12/16] 0.0, 128
        %816 = vxpose.xlu0.b32.cont [13/16] 0.0, 128
        %817 = vxpose.xlu0.b32.cont [14/16] 0.0, 128
        %818 = vxpose.xlu0.b32.cont [15/16] 0.0, 128
        %819 = vxpose.xlu0.b32.end [16/16] 0.0, 128
        %v820 = vpop.trf.xlu0
        %v821 = vpop.trf.xlu0
        %v822 = vpop.trf.xlu0
        %v823 = vpop.trf.xlu0
        %v824 = vpop.trf.xlu0
        %v825 = vpop.trf.xlu0
        %v826 = vpop.trf.xlu0
        %v827 = vpop.trf.xlu0
        %v828 = vpop.trf.xlu0
        %v829 = vpop.trf.xlu0
        %v830 = vpop.trf.xlu0
        %v831 = vpop.trf.xlu0
        %v832 = vpop.trf.xlu0
        %v833 = vpop.trf.xlu0
        %v834 = vpop.trf.xlu0
        %v835 = vpop.trf.xlu0
        %836 = vxpose.xlu0.b32.start [1/16] %v820, 128
        %837 = vxpose.xlu0.b32.cont [2/16] 0.0, 128
        %838 = vxpose.xlu0.b32.cont [3/16] 0.0, 128
        %839 = vxpose.xlu0.b32.cont [4/16] 0.0, 128
        %840 = vxpose.xlu0.b32.cont [5/16] 0.0, 128
        %841 = vxpose.xlu0.b32.cont [6/16] 0.0, 128
        %842 = vxpose.xlu0.b32.cont [7/16] 0.0, 128
        %843 = vxpose.xlu0.b32.cont [8/16] 0.0, 128
        %844 = vxpose.xlu0.b32.cont [9/16] 0.0, 128
        %845 = vxpose.xlu0.b32.cont [10/16] 0.0, 128
        %846 = vxpose.xlu0.b32.cont [11/16] 0.0, 128
        %847 = vxpose.xlu0.b32.cont [12/16] 0.0, 128
        %848 = vxpose.xlu0.b32.cont [13/16] 0.0, 128
        %849 = vxpose.xlu0.b32.cont [14/16] 0.0, 128
        %850 = vxpose.xlu0.b32.cont [15/16] 0.0, 128
        %851 = vxpose.xlu0.b32.end [16/16] 0.0, 128
        %v852 = vpop.trf.xlu0
        %v853 = vpop.trf.xlu0
        %v854 = vpop.trf.xlu0
        %v855 = vpop.trf.xlu0
        %v856 = vpop.trf.xlu0
        %v857 = vpop.trf.xlu0
        %v858 = vpop.trf.xlu0
        %v859 = vpop.trf.xlu0
        %v860 = vpop.trf.xlu0
        %v861 = vpop.trf.xlu0
        %v862 = vpop.trf.xlu0
        %v863 = vpop.trf.xlu0
        %v864 = vpop.trf.xlu0
        %v865 = vpop.trf.xlu0
        %v866 = vpop.trf.xlu0
        %v867 = vpop.trf.xlu0
        %868 = vxpose.xlu0.b32.start [1/16] %v821, 128
        %869 = vxpose.xlu0.b32.cont [2/16] 0.0, 128
        %870 = vxpose.xlu0.b32.cont [3/16] 0.0, 128
        %871 = vxpose.xlu0.b32.cont [4/16] 0.0, 128
        %872 = vxpose.xlu0.b32.cont [5/16] 0.0, 128
        %873 = vxpose.xlu0.b32.cont [6/16] 0.0, 128
        %874 = vxpose.xlu0.b32.cont [7/16] 0.0, 128
        %875 = vxpose.xlu0.b32.cont [8/16] 0.0, 128
        %876 = vxpose.xlu0.b32.cont [9/16] 0.0, 128
        %877 = vxpose.xlu0.b32.cont [10/16] 0.0, 128
        %878 = vxpose.xlu0.b32.cont [11/16] 0.0, 128
        %879 = vxpose.xlu0.b32.cont [12/16] 0.0, 128
        %880 = vxpose.xlu0.b32.cont [13/16] 0.0, 128
        %881 = vxpose.xlu0.b32.cont [14/16] 0.0, 128
        %882 = vxpose.xlu0.b32.cont [15/16] 0.0, 128
        %883 = vxpose.xlu0.b32.end [16/16] 0.0, 128
        %v884 = vpop.trf.xlu0
        %v885 = vpop.trf.xlu0
        %v886 = vpop.trf.xlu0
        %v887 = vpop.trf.xlu0
        %v888 = vpop.trf.xlu0
        %v889 = vpop.trf.xlu0
        %v890 = vpop.trf.xlu0
        %v891 = vpop.trf.xlu0
        %v892 = vpop.trf.xlu0
        %v893 = vpop.trf.xlu0
        %v894 = vpop.trf.xlu0
        %v895 = vpop.trf.xlu0
        %v896 = vpop.trf.xlu0
        %v897 = vpop.trf.xlu0
        %v898 = vpop.trf.xlu0
        %v899 = vpop.trf.xlu0
        %900 = vxpose.xlu0.b32.start [1/16] %v822, 128
        %901 = vxpose.xlu0.b32.cont [2/16] 0.0, 128
        %902 = vxpose.xlu0.b32.cont [3/16] 0.0, 128
        %903 = vxpose.xlu0.b32.cont [4/16] 0.0, 128
        %904 = vxpose.xlu0.b32.cont [5/16] 0.0, 128
        %905 = vxpose.xlu0.b32.cont [6/16] 0.0, 128
        %906 = vxpose.xlu0.b32.cont [7/16] 0.0, 128
        %907 = vxpose.xlu0.b32.cont [8/16] 0.0, 128
        %908 = vxpose.xlu0.b32.cont [9/16] 0.0, 128
        %909 = vxpose.xlu0.b32.cont [10/16] 0.0, 128
        %910 = vxpose.xlu0.b32.cont [11/16] 0.0, 128
        %911 = vxpose.xlu0.b32.cont [12/16] 0.0, 128
        %912 = vxpose.xlu0.b32.cont [13/16] 0.0, 128
        %913 = vxpose.xlu0.b32.cont [14/16] 0.0, 128
        %914 = vxpose.xlu0.b32.cont [15/16] 0.0, 128
        %915 = vxpose.xlu0.b32.end [16/16] 0.0, 128
        %v916 = vpop.trf.xlu0
        %v917 = vpop.trf.xlu0
        %v918 = vpop.trf.xlu0
        %v919 = vpop.trf.xlu0
        %v920 = vpop.trf.xlu0
        %v921 = vpop.trf.xlu0
        %v922 = vpop.trf.xlu0
        %v923 = vpop.trf.xlu0
        %v924 = vpop.trf.xlu0
        %v925 = vpop.trf.xlu0
        %v926 = vpop.trf.xlu0
        %v927 = vpop.trf.xlu0
        %v928 = vpop.trf.xlu0
        %v929 = vpop.trf.xlu0
        %v930 = vpop.trf.xlu0
        %v931 = vpop.trf.xlu0
        %932 = vxpose.xlu0.b32.start [1/16] %v823, 128
        %933 = vxpose.xlu0.b32.cont [2/16] 0.0, 128
        %934 = vxpose.xlu0.b32.cont [3/16] 0.0, 128
        %935 = vxpose.xlu0.b32.cont [4/16] 0.0, 128
        %936 = vxpose.xlu0.b32.cont [5/16] 0.0, 128
        %937 = vxpose.xlu0.b32.cont [6/16] 0.0, 128
        %938 = vxpose.xlu0.b32.cont [7/16] 0.0, 128
        %939 = vxpose.xlu0.b32.cont [8/16] 0.0, 128
        %940 = vxpose.xlu0.b32.cont [9/16] 0.0, 128
        %941 = vxpose.xlu0.b32.cont [10/16] 0.0, 128
        %942 = vxpose.xlu0.b32.cont [11/16] 0.0, 128
        %943 = vxpose.xlu0.b32.cont [12/16] 0.0, 128
        %944 = vxpose.xlu0.b32.cont [13/16] 0.0, 128
        %945 = vxpose.xlu0.b32.cont [14/16] 0.0, 128
        %946 = vxpose.xlu0.b32.cont [15/16] 0.0, 128
        %947 = vxpose.xlu0.b32.end [16/16] 0.0, 128
        %v948 = vpop.trf.xlu0
        %v949 = vpop.trf.xlu0
        %v950 = vpop.trf.xlu0
        %v951 = vpop.trf.xlu0
        %v952 = vpop.trf.xlu0
        %v953 = vpop.trf.xlu0
        %v954 = vpop.trf.xlu0
        %v955 = vpop.trf.xlu0
        %v956 = vpop.trf.xlu0
        %v957 = vpop.trf.xlu0
        %v958 = vpop.trf.xlu0
        %v959 = vpop.trf.xlu0
        %v960 = vpop.trf.xlu0
        %v961 = vpop.trf.xlu0
        %v962 = vpop.trf.xlu0
        %v963 = vpop.trf.xlu0
        %v964 = vld [vmem:[#allocation2] sm:$0xff]
        %v965 = vld [vmem:[#allocation2 + $0x8] sm:$0xff]
        %v966 = vld [vmem:[#allocation2 + $0x10] sm:$0xff]
        %v967 = vld [vmem:[#allocation2 + $0x18] sm:$0xff]
        %v968 = vld [vmem:[#allocation3] sm:$0xff]
        %v969 = vld [vmem:[#allocation3 + $0x8] sm:$0xff]
        %v970 = vld [vmem:[#allocation3 + $0x10] sm:$0xff]
        %v971 = vld [vmem:[#allocation3 + $0x18] sm:$0xff]
        %v972 = vld [vmem:[%s394] sm:$0xf]
        %v973 = vunpack.c.l.bf16 %v972
        %vm974 = vcmask 64512
        %v976 = vsel %vm974, %v852, 0
        %978 = vmatprep.subr.mxu0 0.0
        %979 = vmatpush1.msra.mxu0 %v964
        %980 = vmatprep.subr.mxu0 0.0
        %981 = vmatpush1.msra.mxu0 0.0
        %982 = vmatprep.subr.mxu0 0.0
        %983 = vmatpush1.msra.mxu0 0.0
        %984 = vmatprep.subr.mxu0 0.0
        %985 = vmatpush1.msra.mxu0 0.0
        %986 = vmatprep.subr.mxu0 0.0
        %987 = vmatpush1.msra.mxu0 0.0
        %988 = vmatprep.subr.mxu0 0.0
        %989 = vmatpush1.msra.mxu0 0.0
        %990 = vmatprep.subr.mxu0 0.0
        %991 = vmatpush1.msra.mxu0 0.0
        %992 = vmatprep.subr.mxu0 0.0
        %993 = vmatpush1.msra.mxu0 0.0
        %994 = vmatprep.subr.mxu0 0.0
        %995 = vmatpush1.msra.mxu0 0.0
        %996 = vmatprep.subr.mxu0 0.0
        %997 = vmatpush1.msra.mxu0 0.0
        %998 = vmatprep.subr.mxu0 0.0
        %999 = vmatpush1.msra.mxu0 0.0
        %1000 = vmatprep.subr.mxu0 0.0
        %1001 = vmatpush1.msra.mxu0 0.0
        %1002 = vmatprep.subr.mxu0 0.0
        %1003 = vmatpush1.msra.mxu0 0.0
        %1004 = vmatprep.subr.mxu0 0.0
        %1005 = vmatpush1.msra.mxu0 0.0
        %1006 = vmatprep.subr.mxu0 0.0
        %1007 = vmatpush1.msra.mxu0 0.0
        %1008 = vmatprep.subr.mxu0 0.0
        %1009 = vmatpush1.msra.mxu0 0.0
        %1010 = vmatprep.subr.mxu0 0.0
        %1011 = vmatpush1.msra.mxu0 0.0
        %1012 = vmatprep.subr.mxu0 0.0
        %1013 = vmatpush1.msra.mxu0 0.0
        %1014 = vmatprep.subr.mxu0 0.0
        %1015 = vmatpush1.msra.mxu0 0.0
        %1016 = vmatprep.subr.mxu0 0.0
        %1017 = vmatpush1.msra.mxu0 0.0
        %1018 = vmatprep.subr.mxu0 0.0
        %1019 = vmatpush1.msra.mxu0 0.0
        %1020 = vmatprep.subr.mxu0 0.0
        %1021 = vmatpush1.msra.mxu0 0.0
        %1022 = vmatprep.subr.mxu0 0.0
        %1023 = vmatpush1.msra.mxu0 0.0
        %1024 = vmatprep.subr.mxu0 0.0
        %1025 = vmatpush1.msra.mxu0 0.0
        %1026 = vmatprep.subr.mxu0 0.0
        %1027 = vmatpush1.msra.mxu0 0.0
        %1028 = vmatprep.subr.mxu0 0.0
        %1029 = vmatpush1.msra.mxu0 0.0
        %1030 = vmatprep.subr.mxu0 0.0
        %1031 = vmatpush1.msra.mxu0 0.0
        %1032 = vmatprep.subr.mxu0 0.0
        %1033 = vmatpush1.msra.mxu0 0.0
        %1034 = vmatprep.subr.mxu0 0.0
        %1035 = vmatpush1.msra.mxu0 0.0
        %1036 = vmatprep.subr.mxu0 0.0
        %1037 = vmatpush1.msra.mxu0 0.0
        %1038 = vmatprep.subr.mxu0 0.0
        %1039 = vmatpush1.msra.mxu0 0.0
        %1040 = vmatprep.subr.mxu0 0.0
        %1041 = vmatpush1.msra.mxu0 0.0
        %1042 = vmatprep.mubr.f32.mxu0 0.0
        %1043 = vmatmul.mubr.f32.gmra.mrb[0].mxu0 %v976
        %v1044 = vpop.f32.mrb[0].mxu0
        %v1045 = vadd.f32 %v973, %v1044
        %v1046 = vpop.f32.mrb[0].mxu0
        %1047 = vdwg.mxu0
        %v1049 = vsel %vm974, %v884, 0
        %1051 = vmatprep.subr.mxu0 0.0
        %1052 = vmatpush1.msra.mxu0 %v965
        %1053 = vmatprep.subr.mxu0 0.0
        %1054 = vmatpush1.msra.mxu0 0.0
        %1055 = vmatprep.subr.mxu0 0.0
        %1056 = vmatpush1.msra.mxu0 0.0
        %1057 = vmatprep.subr.mxu0 0.0
        %1058 = vmatpush1.msra.mxu0 0.0
        %1059 = vmatprep.subr.mxu0 0.0
        %1060 = vmatpush1.msra.mxu0 0.0
        %1061 = vmatprep.subr.mxu0 0.0
        %1062 = vmatpush1.msra.mxu0 0.0
        %1063 = vmatprep.subr.mxu0 0.0
        %1064 = vmatpush1.msra.mxu0 0.0
        %1065 = vmatprep.subr.mxu0 0.0
        %1066 = vmatpush1.msra.mxu0 0.0
        %1067 = vmatprep.subr.mxu0 0.0
        %1068 = vmatpush1.msra.mxu0 0.0
        %1069 = vmatprep.subr.mxu0 0.0
        %1070 = vmatpush1.msra.mxu0 0.0
        %1071 = vmatprep.subr.mxu0 0.0
        %1072 = vmatpush1.msra.mxu0 0.0
        %1073 = vmatprep.subr.mxu0 0.0
        %1074 = vmatpush1.msra.mxu0 0.0
        %1075 = vmatprep.subr.mxu0 0.0
        %1076 = vmatpush1.msra.mxu0 0.0
        %1077 = vmatprep.subr.mxu0 0.0
        %1078 = vmatpush1.msra.mxu0 0.0
        %1079 = vmatprep.subr.mxu0 0.0
        %1080 = vmatpush1.msra.mxu0 0.0
        %1081 = vmatprep.subr.mxu0 0.0
        %1082 = vmatpush1.msra.mxu0 0.0
        %1083 = vmatprep.subr.mxu0 0.0
        %1084 = vmatpush1.msra.mxu0 0.0
        %1085 = vmatprep.subr.mxu0 0.0
        %1086 = vmatpush1.msra.mxu0 0.0
        %1087 = vmatprep.subr.mxu0 0.0
        %1088 = vmatpush1.msra.mxu0 0.0
        %1089 = vmatprep.subr.mxu0 0.0
        %1090 = vmatpush1.msra.mxu0 0.0
        %1091 = vmatprep.subr.mxu0 0.0
        %1092 = vmatpush1.msra.mxu0 0.0
        %1093 = vmatprep.subr.mxu0 0.0
        %1094 = vmatpush1.msra.mxu0 0.0
        %1095 = vmatprep.subr.mxu0 0.0
        %1096 = vmatpush1.msra.mxu0 0.0
        %1097 = vmatprep.subr.mxu0 0.0
        %1098 = vmatpush1.msra.mxu0 0.0
        %1099 = vmatprep.subr.mxu0 0.0
        %1100 = vmatpush1.msra.mxu0 0.0
        %1101 = vmatprep.subr.mxu0 0.0
        %1102 = vmatpush1.msra.mxu0 0.0
        %1103 = vmatprep.subr.mxu0 0.0
        %1104 = vmatpush1.msra.mxu0 0.0
        %1105 = vmatprep.subr.mxu0 0.0
        %1106 = vmatpush1.msra.mxu0 0.0
        %1107 = vmatprep.subr.mxu0 0.0
        %1108 = vmatpush1.msra.mxu0 0.0
        %1109 = vmatprep.subr.mxu0 0.0
        %1110 = vmatpush1.msra.mxu0 0.0
        %1111 = vmatprep.subr.mxu0 0.0
        %1112 = vmatpush1.msra.mxu0 0.0
        %1113 = vmatprep.subr.mxu0 0.0
        %1114 = vmatpush1.msra.mxu0 0.0
        %1115 = vmatprep.mubr.f32.mxu0 0.0
        %1116 = vmatmul.mubr.f32.gmra.mrb[0].mxu0 %v1049
        %v1117 = vpop.f32.mrb[0].mxu0
        %v1118 = vadd.f32 %v973, %v1117
        %v1119 = vpop.f32.mrb[0].mxu0
        %1120 = vdwg.mxu0
        %v1122 = vsel %vm974, %v916, 0
        %1124 = vmatprep.subr.mxu0 0.0
        %1125 = vmatpush1.msra.mxu0 %v966
        %1126 = vmatprep.subr.mxu0 0.0
        %1127 = vmatpush1.msra.mxu0 0.0
        %1128 = vmatprep.subr.mxu0 0.0
        %1129 = vmatpush1.msra.mxu0 0.0
        %1130 = vmatprep.subr.mxu0 0.0
        %1131 = vmatpush1.msra.mxu0 0.0
        %1132 = vmatprep.subr.mxu0 0.0
        %1133 = vmatpush1.msra.mxu0 0.0
        %1134 = vmatprep.subr.mxu0 0.0
        %1135 = vmatpush1.msra.mxu0 0.0
        %1136 = vmatprep.subr.mxu0 0.0
        %1137 = vmatpush1.msra.mxu0 0.0
        %1138 = vmatprep.subr.mxu0 0.0
        %1139 = vmatpush1.msra.mxu0 0.0
        %1140 = vmatprep.subr.mxu0 0.0
        %1141 = vmatpush1.msra.mxu0 0.0
        %1142 = vmatprep.subr.mxu0 0.0
        %1143 = vmatpush1.msra.mxu0 0.0
        %1144 = vmatprep.subr.mxu0 0.0
        %1145 = vmatpush1.msra.mxu0 0.0
        %1146 = vmatprep.subr.mxu0 0.0
        %1147 = vmatpush1.msra.mxu0 0.0
        %1148 = vmatprep.subr.mxu0 0.0
        %1149 = vmatpush1.msra.mxu0 0.0
        %1150 = vmatprep.subr.mxu0 0.0
        %1151 = vmatpush1.msra.mxu0 0.0
        %1152 = vmatprep.subr.mxu0 0.0
        %1153 = vmatpush1.msra.mxu0 0.0
        %1154 = vmatprep.subr.mxu0 0.0
        %1155 = vmatpush1.msra.mxu0 0.0
        %1156 = vmatprep.subr.mxu0 0.0
        %1157 = vmatpush1.msra.mxu0 0.0
        %1158 = vmatprep.subr.mxu0 0.0
        %1159 = vmatpush1.msra.mxu0 0.0
        %1160 = vmatprep.subr.mxu0 0.0
        %1161 = vmatpush1.msra.mxu0 0.0
        %1162 = vmatprep.subr.mxu0 0.0
        %1163 = vmatpush1.msra.mxu0 0.0
        %1164 = vmatprep.subr.mxu0 0.0
        %1165 = vmatpush1.msra.mxu0 0.0
        %1166 = vmatprep.subr.mxu0 0.0
        %1167 = vmatpush1.msra.mxu0 0.0
        %1168 = vmatprep.subr.mxu0 0.0
        %1169 = vmatpush1.msra.mxu0 0.0
        %1170 = vmatprep.subr.mxu0 0.0
        %1171 = vmatpush1.msra.mxu0 0.0
        %1172 = vmatprep.subr.mxu0 0.0
        %1173 = vmatpush1.msra.mxu0 0.0
        %1174 = vmatprep.subr.mxu0 0.0
        %1175 = vmatpush1.msra.mxu0 0.0
        %1176 = vmatprep.subr.mxu0 0.0
        %1177 = vmatpush1.msra.mxu0 0.0
        %1178 = vmatprep.subr.mxu0 0.0
        %1179 = vmatpush1.msra.mxu0 0.0
        %1180 = vmatprep.subr.mxu0 0.0
        %1181 = vmatpush1.msra.mxu0 0.0
        %1182 = vmatprep.subr.mxu0 0.0
        %1183 = vmatpush1.msra.mxu0 0.0
        %1184 = vmatprep.subr.mxu0 0.0
        %1185 = vmatpush1.msra.mxu0 0.0
        %1186 = vmatprep.subr.mxu0 0.0
        %1187 = vmatpush1.msra.mxu0 0.0
        %1188 = vmatprep.mubr.f32.mxu0 0.0
        %1189 = vmatmul.mubr.f32.gmra.mrb[0].mxu0 %v1122
        %v1190 = vpop.f32.mrb[0].mxu0
        %v1191 = vadd.f32 %v973, %v1190
        %v1192 = vpop.f32.mrb[0].mxu0
        %1193 = vdwg.mxu0
        %v1195 = vsel %vm974, %v948, 0
        %1197 = vmatprep.subr.mxu0 0.0
        %1198 = vmatpush1.msra.mxu0 %v967
        %1199 = vmatprep.subr.mxu0 0.0
        %1200 = vmatpush1.msra.mxu0 0.0
        %1201 = vmatprep.subr.mxu0 0.0
        %1202 = vmatpush1.msra.mxu0 0.0
        %1203 = vmatprep.subr.mxu0 0.0
        %1204 = vmatpush1.msra.mxu0 0.0
        %1205 = vmatprep.subr.mxu0 0.0
        %1206 = vmatpush1.msra.mxu0 0.0
        %1207 = vmatprep.subr.mxu0 0.0
        %1208 = vmatpush1.msra.mxu0 0.0
        %1209 = vmatprep.subr.mxu0 0.0
        %1210 = vmatpush1.msra.mxu0 0.0
        %1211 = vmatprep.subr.mxu0 0.0
        %1212 = vmatpush1.msra.mxu0 0.0
        %1213 = vmatprep.subr.mxu0 0.0
        %1214 = vmatpush1.msra.mxu0 0.0
        %1215 = vmatprep.subr.mxu0 0.0
        %1216 = vmatpush1.msra.mxu0 0.0
        %1217 = vmatprep.subr.mxu0 0.0
        %1218 = vmatpush1.msra.mxu0 0.0
        %1219 = vmatprep.subr.mxu0 0.0
        %1220 = vmatpush1.msra.mxu0 0.0
        %1221 = vmatprep.subr.mxu0 0.0
        %1222 = vmatpush1.msra.mxu0 0.0
        %1223 = vmatprep.subr.mxu0 0.0
        %1224 = vmatpush1.msra.mxu0 0.0
        %1225 = vmatprep.subr.mxu0 0.0
        %1226 = vmatpush1.msra.mxu0 0.0
        %1227 = vmatprep.subr.mxu0 0.0
        %1228 = vmatpush1.msra.mxu0 0.0
        %1229 = vmatprep.subr.mxu0 0.0
        %1230 = vmatpush1.msra.mxu0 0.0
        %1231 = vmatprep.subr.mxu0 0.0
        %1232 = vmatpush1.msra.mxu0 0.0
        %1233 = vmatprep.subr.mxu0 0.0
        %1234 = vmatpush1.msra.mxu0 0.0
        %1235 = vmatprep.subr.mxu0 0.0
        %1236 = vmatpush1.msra.mxu0 0.0
        %1237 = vmatprep.subr.mxu0 0.0
        %1238 = vmatpush1.msra.mxu0 0.0
        %1239 = vmatprep.subr.mxu0 0.0
        %1240 = vmatpush1.msra.mxu0 0.0
        %1241 = vmatprep.subr.mxu0 0.0
        %1242 = vmatpush1.msra.mxu0 0.0
        %1243 = vmatprep.subr.mxu0 0.0
        %1244 = vmatpush1.msra.mxu0 0.0
        %1245 = vmatprep.subr.mxu0 0.0
        %1246 = vmatpush1.msra.mxu0 0.0
        %1247 = vmatprep.subr.mxu0 0.0
        %1248 = vmatpush1.msra.mxu0 0.0
        %1249 = vmatprep.subr.mxu0 0.0
        %1250 = vmatpush1.msra.mxu0 0.0
        %1251 = vmatprep.subr.mxu0 0.0
        %1252 = vmatpush1.msra.mxu0 0.0
        %1253 = vmatprep.subr.mxu0 0.0
        %1254 = vmatpush1.msra.mxu0 0.0
        %1255 = vmatprep.subr.mxu0 0.0
        %1256 = vmatpush1.msra.mxu0 0.0
        %1257 = vmatprep.subr.mxu0 0.0
        %1258 = vmatpush1.msra.mxu0 0.0
        %1259 = vmatprep.subr.mxu0 0.0
        %1260 = vmatpush1.msra.mxu0 0.0
        %1261 = vmatprep.mubr.f32.mxu0 0.0
        %1262 = vmatmul.mubr.f32.gmra.mrb[0].mxu0 %v1195
        %v1263 = vpop.f32.mrb[0].mxu0
        %v1264 = vadd.f32 %v973, %v1263
        %v1265 = vpop.f32.mrb[0].mxu0
        %1266 = vdwg.mxu0
        %v1267 = vsel %vm974, %v1045, -inf
        %1268 = vmax.xlane.f32.xlu0 %v1267
        %v1269 = vpop.xlane.xlu0 %1268
        %v1270 = vsel %vm974, %v1118, -inf
        %1271 = vmax.xlane.f32.xlu0 %v1270
        %v1272 = vpop.xlane.xlu0 %1271
        %v1273 = vsel %vm974, %v1191, -inf
        %1274 = vmax.xlane.f32.xlu0 %v1273
        %v1275 = vpop.xlane.xlu0 %1274
        %v1276 = vsel %vm974, %v1264, -inf
        %1277 = vmax.xlane.f32.xlu0 %v1276
        %v1278 = vpop.xlane.xlu0 %1277
        %v1279 = vsub.f32 -inf, %v1269
        %v1280 = vsub.f32 -inf, %v1272
        %v1281 = vsub.f32 -inf, %v1275
        %v1282 = vsub.f32 -inf, %v1278
        %v1283 = vmul.f32 %v1279, 1.442695
        %v1284 = vpow.pop %v1283
        %v1285 = vmul.f32 %v1280, 1.442695
        %v1286 = vpow.pop %v1285
        %v1287 = vmul.f32 %v1281, 1.442695
        %v1288 = vpow.pop %v1287
        %v1289 = vmul.f32 %v1282, 1.442695
        %v1290 = vpow.pop %v1289
        %v1291 = vsub.f32 %v1045, %v1269
        %v1292 = vsub.f32 %v1118, %v1272
        %v1293 = vsub.f32 %v1191, %v1275
        %v1294 = vsub.f32 %v1264, %v1278
        %v1295 = vmul.f32 %v1291, 1.442695
        %v1296 = vpow.pop %v1295
        %v1297 = vmul.f32 %v1292, 1.442695
        %v1298 = vpow.pop %v1297
        %v1299 = vmul.f32 %v1293, 1.442695
        %v1300 = vpow.pop %v1299
        %v1301 = vmul.f32 %v1294, 1.442695
        %v1302 = vpow.pop %v1301
        %v1303 = vmul.f32 %v1284, 0.0
        %v1304 = vmul.f32 %v1286, 0.0
        %v1305 = vmul.f32 %v1288, 0.0
        %v1306 = vmul.f32 %v1290, 0.0
        %v1307 = vsel %vm974, %v1296, 0.0
        %1308 = vadd.xlane.f32.xlu0 %v1307
        %v1309 = vpop.xlane.xlu0 %1308
        %v1310 = vsel %vm974, %v1298, 0.0
        %1311 = vadd.xlane.f32.xlu0 %v1310
        %v1312 = vpop.xlane.xlu0 %1311
        %v1313 = vsel %vm974, %v1300, 0.0
        %1314 = vadd.xlane.f32.xlu0 %v1313
        %v1315 = vpop.xlane.xlu0 %1314
        %v1316 = vsel %vm974, %v1302, 0.0
        %1317 = vadd.xlane.f32.xlu0 %v1316
        %v1318 = vpop.xlane.xlu0 %1317
        %v1319 = vadd.f32 %v1303, %v1309
        %v1320 = vadd.f32 %v1304, %v1312
        %v1321 = vadd.f32 %v1305, %v1315
        %v1322 = vadd.f32 %v1306, %v1318
        %v1324 = vsel %vm974, %v1296, 0
        %1326 = vmatprep.subr.mxu0 0.0
        %1327 = vmatpush1.msra.mxu0 %v968
        %1328 = vmatprep.subr.mxu0 0.0
        %1329 = vmatpush1.msra.mxu0 0.0
        %1330 = vmatprep.subr.mxu0 0.0
        %1331 = vmatpush1.msra.mxu0 0.0
        %1332 = vmatprep.subr.mxu0 0.0
        %1333 = vmatpush1.msra.mxu0 0.0
        %1334 = vmatprep.subr.mxu0 0.0
        %1335 = vmatpush1.msra.mxu0 0.0
        %1336 = vmatprep.subr.mxu0 0.0
        %1337 = vmatpush1.msra.mxu0 0.0
        %1338 = vmatprep.subr.mxu0 0.0
        %1339 = vmatpush1.msra.mxu0 0.0
        %1340 = vmatprep.subr.mxu0 0.0
        %1341 = vmatpush1.msra.mxu0 0.0
        %1342 = vmatprep.subr.mxu0 0.0
        %1343 = vmatpush1.msra.mxu0 0.0
        %1344 = vmatprep.subr.mxu0 0.0
        %1345 = vmatpush1.msra.mxu0 0.0
        %1346 = vmatprep.subr.mxu0 0.0
        %1347 = vmatpush1.msra.mxu0 0.0
        %1348 = vmatprep.subr.mxu0 0.0
        %1349 = vmatpush1.msra.mxu0 0.0
        %1350 = vmatprep.subr.mxu0 0.0
        %1351 = vmatpush1.msra.mxu0 0.0
        %1352 = vmatprep.subr.mxu0 0.0
        %1353 = vmatpush1.msra.mxu0 0.0
        %1354 = vmatprep.subr.mxu0 0.0
        %1355 = vmatpush1.msra.mxu0 0.0
        %1356 = vmatprep.subr.mxu0 0.0
        %1357 = vmatpush1.msra.mxu0 0.0
        %1358 = vmatprep.subr.mxu0 0.0
        %1359 = vmatpush1.msra.mxu0 0.0
        %1360 = vmatprep.subr.mxu0 0.0
        %1361 = vmatpush1.msra.mxu0 0.0
        %1362 = vmatprep.subr.mxu0 0.0
        %1363 = vmatpush1.msra.mxu0 0.0
        %1364 = vmatprep.subr.mxu0 0.0
        %1365 = vmatpush1.msra.mxu0 0.0
        %1366 = vmatprep.subr.mxu0 0.0
        %1367 = vmatpush1.msra.mxu0 0.0
        %1368 = vmatprep.subr.mxu0 0.0
        %1369 = vmatpush1.msra.mxu0 0.0
        %1370 = vmatprep.subr.mxu0 0.0
        %1371 = vmatpush1.msra.mxu0 0.0
        %1372 = vmatprep.subr.mxu0 0.0
        %1373 = vmatpush1.msra.mxu0 0.0
        %1374 = vmatprep.subr.mxu0 0.0
        %1375 = vmatpush1.msra.mxu0 0.0
        %1376 = vmatprep.subr.mxu0 0.0
        %1377 = vmatpush1.msra.mxu0 0.0
        %1378 = vmatprep.subr.mxu0 0.0
        %1379 = vmatpush1.msra.mxu0 0.0
        %1380 = vmatprep.subr.mxu0 0.0
        %1381 = vmatpush1.msra.mxu0 0.0
        %1382 = vmatprep.subr.mxu0 0.0
        %1383 = vmatpush1.msra.mxu0 0.0
        %1384 = vmatprep.subr.mxu0 0.0
        %1385 = vmatpush1.msra.mxu0 0.0
        %1386 = vmatprep.subr.mxu0 0.0
        %1387 = vmatpush1.msra.mxu0 0.0
        %1388 = vmatprep.subr.mxu0 0.0
        %1389 = vmatpush1.msra.mxu0 0.0
        %1390 = vmatprep.mubr.f32.mxu0 0.0
        %1391 = vmatmul.mubr.f32.gmra.mrb[0].mxu0 %v1324
        %v1392 = vpop.f32.mrb[0].mxu0
        %v1393 = vadd.f32 0.0, %v1392
        %v1394 = vpop.f32.mrb[0].mxu0
        %1395 = vdwg.mxu0
        %v1397 = vsel %vm974, %v1298, 0
        %1399 = vmatprep.subr.mxu0 0.0
        %1400 = vmatpush1.msra.mxu0 %v969
        %1401 = vmatprep.subr.mxu0 0.0
        %1402 = vmatpush1.msra.mxu0 0.0
        %1403 = vmatprep.subr.mxu0 0.0
        %1404 = vmatpush1.msra.mxu0 0.0
        %1405 = vmatprep.subr.mxu0 0.0
        %1406 = vmatpush1.msra.mxu0 0.0
        %1407 = vmatprep.subr.mxu0 0.0
        %1408 = vmatpush1.msra.mxu0 0.0
        %1409 = vmatprep.subr.mxu0 0.0
        %1410 = vmatpush1.msra.mxu0 0.0
        %1411 = vmatprep.subr.mxu0 0.0
        %1412 = vmatpush1.msra.mxu0 0.0
        %1413 = vmatprep.subr.mxu0 0.0
        %1414 = vmatpush1.msra.mxu0 0.0
        %1415 = vmatprep.subr.mxu0 0.0
        %1416 = vmatpush1.msra.mxu0 0.0
        %1417 = vmatprep.subr.mxu0 0.0
        %1418 = vmatpush1.msra.mxu0 0.0
        %1419 = vmatprep.subr.mxu0 0.0
        %1420 = vmatpush1.msra.mxu0 0.0
        %1421 = vmatprep.subr.mxu0 0.0
        %1422 = vmatpush1.msra.mxu0 0.0
        %1423 = vmatprep.subr.mxu0 0.0
        %1424 = vmatpush1.msra.mxu0 0.0
        %1425 = vmatprep.subr.mxu0 0.0
        %1426 = vmatpush1.msra.mxu0 0.0
        %1427 = vmatprep.subr.mxu0 0.0
        %1428 = vmatpush1.msra.mxu0 0.0
        %1429 = vmatprep.subr.mxu0 0.0
        %1430 = vmatpush1.msra.mxu0 0.0
        %1431 = vmatprep.subr.mxu0 0.0
        %1432 = vmatpush1.msra.mxu0 0.0
        %1433 = vmatprep.subr.mxu0 0.0
        %1434 = vmatpush1.msra.mxu0 0.0
        %1435 = vmatprep.subr.mxu0 0.0
        %1436 = vmatpush1.msra.mxu0 0.0
        %1437 = vmatprep.subr.mxu0 0.0
        %1438 = vmatpush1.msra.mxu0 0.0
        %1439 = vmatprep.subr.mxu0 0.0
        %1440 = vmatpush1.msra.mxu0 0.0
        %1441 = vmatprep.subr.mxu0 0.0
        %1442 = vmatpush1.msra.mxu0 0.0
        %1443 = vmatprep.subr.mxu0 0.0
        %1444 = vmatpush1.msra.mxu0 0.0
        %1445 = vmatprep.subr.mxu0 0.0
        %1446 = vmatpush1.msra.mxu0 0.0
        %1447 = vmatprep.subr.mxu0 0.0
        %1448 = vmatpush1.msra.mxu0 0.0
        %1449 = vmatprep.subr.mxu0 0.0
        %1450 = vmatpush1.msra.mxu0 0.0
        %1451 = vmatprep.subr.mxu0 0.0
        %1452 = vmatpush1.msra.mxu0 0.0
        %1453 = vmatprep.subr.mxu0 0.0
        %1454 = vmatpush1.msra.mxu0 0.0
        %1455 = vmatprep.subr.mxu0 0.0
        %1456 = vmatpush1.msra.mxu0 0.0
        %1457 = vmatprep.subr.mxu0 0.0
        %1458 = vmatpush1.msra.mxu0 0.0
        %1459 = vmatprep.subr.mxu0 0.0
        %1460 = vmatpush1.msra.mxu0 0.0
        %1461 = vmatprep.subr.mxu0 0.0
        %1462 = vmatpush1.msra.mxu0 0.0
        %1463 = vmatprep.mubr.f32.mxu0 0.0
        %1464 = vmatmul.mubr.f32.gmra.mrb[0].mxu0 %v1397
        %v1465 = vpop.f32.mrb[0].mxu0
        %v1466 = vadd.f32 0.0, %v1465
        %v1467 = vpop.f32.mrb[0].mxu0
        %1468 = vdwg.mxu0
        %v1470 = vsel %vm974, %v1300, 0
        %1472 = vmatprep.subr.mxu0 0.0
        %1473 = vmatpush1.msra.mxu0 %v970
        %1474 = vmatprep.subr.mxu0 0.0
        %1475 = vmatpush1.msra.mxu0 0.0
        %1476 = vmatprep.subr.mxu0 0.0
        %1477 = vmatpush1.msra.mxu0 0.0
        %1478 = vmatprep.subr.mxu0 0.0
        %1479 = vmatpush1.msra.mxu0 0.0
        %1480 = vmatprep.subr.mxu0 0.0
        %1481 = vmatpush1.msra.mxu0 0.0
        %1482 = vmatprep.subr.mxu0 0.0
        %1483 = vmatpush1.msra.mxu0 0.0
        %1484 = vmatprep.subr.mxu0 0.0
        %1485 = vmatpush1.msra.mxu0 0.0
        %1486 = vmatprep.subr.mxu0 0.0
        %1487 = vmatpush1.msra.mxu0 0.0
        %1488 = vmatprep.subr.mxu0 0.0
        %1489 = vmatpush1.msra.mxu0 0.0
        %1490 = vmatprep.subr.mxu0 0.0
        %1491 = vmatpush1.msra.mxu0 0.0
        %1492 = vmatprep.subr.mxu0 0.0
        %1493 = vmatpush1.msra.mxu0 0.0
        %1494 = vmatprep.subr.mxu0 0.0
        %1495 = vmatpush1.msra.mxu0 0.0
        %1496 = vmatprep.subr.mxu0 0.0
        %1497 = vmatpush1.msra.mxu0 0.0
        %1498 = vmatprep.subr.mxu0 0.0
        %1499 = vmatpush1.msra.mxu0 0.0
        %1500 = vmatprep.subr.mxu0 0.0
        %1501 = vmatpush1.msra.mxu0 0.0
        %1502 = vmatprep.subr.mxu0 0.0
        %1503 = vmatpush1.msra.mxu0 0.0
        %1504 = vmatprep.subr.mxu0 0.0
        %1505 = vmatpush1.msra.mxu0 0.0
        %1506 = vmatprep.subr.mxu0 0.0
        %1507 = vmatpush1.msra.mxu0 0.0
        %1508 = vmatprep.subr.mxu0 0.0
        %1509 = vmatpush1.msra.mxu0 0.0
        %1510 = vmatprep.subr.mxu0 0.0
        %1511 = vmatpush1.msra.mxu0 0.0
        %1512 = vmatprep.subr.mxu0 0.0
        %1513 = vmatpush1.msra.mxu0 0.0
        %1514 = vmatprep.subr.mxu0 0.0
        %1515 = vmatpush1.msra.mxu0 0.0
        %1516 = vmatprep.subr.mxu0 0.0
        %1517 = vmatpush1.msra.mxu0 0.0
        %1518 = vmatprep.subr.mxu0 0.0
        %1519 = vmatpush1.msra.mxu0 0.0
        %1520 = vmatprep.subr.mxu0 0.0
        %1521 = vmatpush1.msra.mxu0 0.0
        %1522 = vmatprep.subr.mxu0 0.0
        %1523 = vmatpush1.msra.mxu0 0.0
        %1524 = vmatprep.subr.mxu0 0.0
        %1525 = vmatpush1.msra.mxu0 0.0
        %1526 = vmatprep.subr.mxu0 0.0
        %1527 = vmatpush1.msra.mxu0 0.0
        %1528 = vmatprep.subr.mxu0 0.0
        %1529 = vmatpush1.msra.mxu0 0.0
        %1530 = vmatprep.subr.mxu0 0.0
        %1531 = vmatpush1.msra.mxu0 0.0
        %1532 = vmatprep.subr.mxu0 0.0
        %1533 = vmatpush1.msra.mxu0 0.0
        %1534 = vmatprep.subr.mxu0 0.0
        %1535 = vmatpush1.msra.mxu0 0.0
        %1536 = vmatprep.mubr.f32.mxu0 0.0
        %1537 = vmatmul.mubr.f32.gmra.mrb[0].mxu0 %v1470
        %v1538 = vpop.f32.mrb[0].mxu0
        %v1539 = vadd.f32 0.0, %v1538
        %v1540 = vpop.f32.mrb[0].mxu0
        %1541 = vdwg.mxu0
        %v1543 = vsel %vm974, %v1302, 0
        %1545 = vmatprep.subr.mxu0 0.0
        %1546 = vmatpush1.msra.mxu0 %v971
        %1547 = vmatprep.subr.mxu0 0.0
        %1548 = vmatpush1.msra.mxu0 0.0
        %1549 = vmatprep.subr.mxu0 0.0
        %1550 = vmatpush1.msra.mxu0 0.0
        %1551 = vmatprep.subr.mxu0 0.0
        %1552 = vmatpush1.msra.mxu0 0.0
        %1553 = vmatprep.subr.mxu0 0.0
        %1554 = vmatpush1.msra.mxu0 0.0
        %1555 = vmatprep.subr.mxu0 0.0
        %1556 = vmatpush1.msra.mxu0 0.0
        %1557 = vmatprep.subr.mxu0 0.0
        %1558 = vmatpush1.msra.mxu0 0.0
        %1559 = vmatprep.subr.mxu0 0.0
        %1560 = vmatpush1.msra.mxu0 0.0
        %1561 = vmatprep.subr.mxu0 0.0
        %1562 = vmatpush1.msra.mxu0 0.0
        %1563 = vmatprep.subr.mxu0 0.0
        %1564 = vmatpush1.msra.mxu0 0.0
        %1565 = vmatprep.subr.mxu0 0.0
        %1566 = vmatpush1.msra.mxu0 0.0
        %1567 = vmatprep.subr.mxu0 0.0
        %1568 = vmatpush1.msra.mxu0 0.0
        %1569 = vmatprep.subr.mxu0 0.0
        %1570 = vmatpush1.msra.mxu0 0.0
        %1571 = vmatprep.subr.mxu0 0.0
        %1572 = vmatpush1.msra.mxu0 0.0
        %1573 = vmatprep.subr.mxu0 0.0
        %1574 = vmatpush1.msra.mxu0 0.0
        %1575 = vmatprep.subr.mxu0 0.0
        %1576 = vmatpush1.msra.mxu0 0.0
        %1577 = vmatprep.subr.mxu0 0.0
        %1578 = vmatpush1.msra.mxu0 0.0
        %1579 = vmatprep.subr.mxu0 0.0
        %1580 = vmatpush1.msra.mxu0 0.0
        %1581 = vmatprep.subr.mxu0 0.0
        %1582 = vmatpush1.msra.mxu0 0.0
        %1583 = vmatprep.subr.mxu0 0.0
        %1584 = vmatpush1.msra.mxu0 0.0
        %1585 = vmatprep.subr.mxu0 0.0
        %1586 = vmatpush1.msra.mxu0 0.0
        %1587 = vmatprep.subr.mxu0 0.0
        %1588 = vmatpush1.msra.mxu0 0.0
        %1589 = vmatprep.subr.mxu0 0.0
        %1590 = vmatpush1.msra.mxu0 0.0
        %1591 = vmatprep.subr.mxu0 0.0
        %1592 = vmatpush1.msra.mxu0 0.0
        %1593 = vmatprep.subr.mxu0 0.0
        %1594 = vmatpush1.msra.mxu0 0.0
        %1595 = vmatprep.subr.mxu0 0.0
        %1596 = vmatpush1.msra.mxu0 0.0
        %1597 = vmatprep.subr.mxu0 0.0
        %1598 = vmatpush1.msra.mxu0 0.0
        %1599 = vmatprep.subr.mxu0 0.0
        %1600 = vmatpush1.msra.mxu0 0.0
        %1601 = vmatprep.subr.mxu0 0.0
        %1602 = vmatpush1.msra.mxu0 0.0
        %1603 = vmatprep.subr.mxu0 0.0
        %1604 = vmatpush1.msra.mxu0 0.0
        %1605 = vmatprep.subr.mxu0 0.0
        %1606 = vmatpush1.msra.mxu0 0.0
        %1607 = vmatprep.subr.mxu0 0.0
        %1608 = vmatpush1.msra.mxu0 0.0
        %1609 = vmatprep.mubr.f32.mxu0 0.0
        %1610 = vmatmul.mubr.f32.gmra.mrb[0].mxu0 %v1543
        %v1611 = vpop.f32.mrb[0].mxu0
        %v1612 = vadd.f32 0.0, %v1611
        %v1613 = vpop.f32.mrb[0].mxu0
        %1614 = vdwg.mxu0
        %v1615 = vadd.f32 %v1303, %v1393
        %v1616 = vadd.f32 %v1304, %v1466
        %v1617 = vadd.f32 %v1305, %v1539
        %v1618 = vadd.f32 %v1306, %v1612
        %v1619 = vrcp.pop %v1319
        %v1620 = vrcp.pop %v1320
        %v1621 = vrcp.pop %v1321
        %v1622 = vrcp.pop %v1322
        %v1623 = vmul.f32 %v1615, %v1619
        %v1624 = vmul.f32 %v1616, %v1620
        %v1625 = vmul.f32 %v1617, %v1621
        %v1626 = vmul.f32 %v1618, %v1622
        %1627 = vxpose.xlu0.b32.start [1/16] %v1623, 128
        %1628 = vxpose.xlu0.b32.cont [2/16] 0.0, 128
        %1629 = vxpose.xlu0.b32.cont [3/16] 0.0, 128
        %1630 = vxpose.xlu0.b32.cont [4/16] 0.0, 128
        %1631 = vxpose.xlu0.b32.cont [5/16] 0.0, 128
        %1632 = vxpose.xlu0.b32.cont [6/16] 0.0, 128
        %1633 = vxpose.xlu0.b32.cont [7/16] 0.0, 128
        %1634 = vxpose.xlu0.b32.cont [8/16] 0.0, 128
        %1635 = vxpose.xlu0.b32.cont [9/16] 0.0, 128
        %1636 = vxpose.xlu0.b32.cont [10/16] 0.0, 128
        %1637 = vxpose.xlu0.b32.cont [11/16] 0.0, 128
        %1638 = vxpose.xlu0.b32.cont [12/16] 0.0, 128
        %1639 = vxpose.xlu0.b32.cont [13/16] 0.0, 128
        %1640 = vxpose.xlu0.b32.cont [14/16] 0.0, 128
        %1641 = vxpose.xlu0.b32.cont [15/16] 0.0, 128
        %1642 = vxpose.xlu0.b32.end [16/16] 0.0, 128
        %v1643 = vpop.trf.xlu0
        %v1644 = vpop.trf.xlu0
        %v1645 = vpop.trf.xlu0
        %v1646 = vpop.trf.xlu0
        %v1647 = vpop.trf.xlu0
        %v1648 = vpop.trf.xlu0
        %v1649 = vpop.trf.xlu0
        %v1650 = vpop.trf.xlu0
        %v1651 = vpop.trf.xlu0
        %v1652 = vpop.trf.xlu0
        %v1653 = vpop.trf.xlu0
        %v1654 = vpop.trf.xlu0
        %v1655 = vpop.trf.xlu0
        %v1656 = vpop.trf.xlu0
        %v1657 = vpop.trf.xlu0
        %v1658 = vpop.trf.xlu0
        %1659 = vxpose.xlu0.b32.start [1/16] %v1624, 128
        %1660 = vxpose.xlu0.b32.cont [2/16] 0.0, 128
        %1661 = vxpose.xlu0.b32.cont [3/16] 0.0, 128
        %1662 = vxpose.xlu0.b32.cont [4/16] 0.0, 128
        %1663 = vxpose.xlu0.b32.cont [5/16] 0.0, 128
        %1664 = vxpose.xlu0.b32.cont [6/16] 0.0, 128
        %1665 = vxpose.xlu0.b32.cont [7/16] 0.0, 128
        %1666 = vxpose.xlu0.b32.cont [8/16] 0.0, 128
        %1667 = vxpose.xlu0.b32.cont [9/16] 0.0, 128
        %1668 = vxpose.xlu0.b32.cont [10/16] 0.0, 128
        %1669 = vxpose.xlu0.b32.cont [11/16] 0.0, 128
        %1670 = vxpose.xlu0.b32.cont [12/16] 0.0, 128
        %1671 = vxpose.xlu0.b32.cont [13/16] 0.0, 128
        %1672 = vxpose.xlu0.b32.cont [14/16] 0.0, 128
        %1673 = vxpose.xlu0.b32.cont [15/16] 0.0, 128
        %1674 = vxpose.xlu0.b32.end [16/16] 0.0, 128
        %v1675 = vpop.trf.xlu0
        %v1676 = vpop.trf.xlu0
        %v1677 = vpop.trf.xlu0
        %v1678 = vpop.trf.xlu0
        %v1679 = vpop.trf.xlu0
        %v1680 = vpop.trf.xlu0
        %v1681 = vpop.trf.xlu0
        %v1682 = vpop.trf.xlu0
        %v1683 = vpop.trf.xlu0
        %v1684 = vpop.trf.xlu0
        %v1685 = vpop.trf.xlu0
        %v1686 = vpop.trf.xlu0
        %v1687 = vpop.trf.xlu0
        %v1688 = vpop.trf.xlu0
        %v1689 = vpop.trf.xlu0
        %v1690 = vpop.trf.xlu0
        %1691 = vxpose.xlu0.b32.start [1/16] %v1625, 128
        %1692 = vxpose.xlu0.b32.cont [2/16] 0.0, 128
        %1693 = vxpose.xlu0.b32.cont [3/16] 0.0, 128
        %1694 = vxpose.xlu0.b32.cont [4/16] 0.0, 128
        %1695 = vxpose.xlu0.b32.cont [5/16] 0.0, 128
        %1696 = vxpose.xlu0.b32.cont [6/16] 0.0, 128
        %1697 = vxpose.xlu0.b32.cont [7/16] 0.0, 128
        %1698 = vxpose.xlu0.b32.cont [8/16] 0.0, 128
        %1699 = vxpose.xlu0.b32.cont [9/16] 0.0, 128
        %1700 = vxpose.xlu0.b32.cont [10/16] 0.0, 128
        %1701 = vxpose.xlu0.b32.cont [11/16] 0.0, 128
        %1702 = vxpose.xlu0.b32.cont [12/16] 0.0, 128
        %1703 = vxpose.xlu0.b32.cont [13/16] 0.0, 128
        %1704 = vxpose.xlu0.b32.cont [14/16] 0.0, 128
        %1705 = vxpose.xlu0.b32.cont [15/16] 0.0, 128
        %1706 = vxpose.xlu0.b32.end [16/16] 0.0, 128
        %v1707 = vpop.trf.xlu0
        %v1708 = vpop.trf.xlu0
        %v1709 = vpop.trf.xlu0
        %v1710 = vpop.trf.xlu0
        %v1711 = vpop.trf.xlu0
        %v1712 = vpop.trf.xlu0
        %v1713 = vpop.trf.xlu0
        %v1714 = vpop.trf.xlu0
        %v1715 = vpop.trf.xlu0
        %v1716 = vpop.trf.xlu0
        %v1717 = vpop.trf.xlu0
        %v1718 = vpop.trf.xlu0
        %v1719 = vpop.trf.xlu0
        %v1720 = vpop.trf.xlu0
        %v1721 = vpop.trf.xlu0
        %v1722 = vpop.trf.xlu0
        %1723 = vxpose.xlu0.b32.start [1/16] %v1626, 128
        %1724 = vxpose.xlu0.b32.cont [2/16] 0.0, 128
        %1725 = vxpose.xlu0.b32.cont [3/16] 0.0, 128
        %1726 = vxpose.xlu0.b32.cont [4/16] 0.0, 128
        %1727 = vxpose.xlu0.b32.cont [5/16] 0.0, 128
        %1728 = vxpose.xlu0.b32.cont [6/16] 0.0, 128
        %1729 = vxpose.xlu0.b32.cont [7/16] 0.0, 128
        %1730 = vxpose.xlu0.b32.cont [8/16] 0.0, 128
        %1731 = vxpose.xlu0.b32.cont [9/16] 0.0, 128
        %1732 = vxpose.xlu0.b32.cont [10/16] 0.0, 128
        %1733 = vxpose.xlu0.b32.cont [11/16] 0.0, 128
        %1734 = vxpose.xlu0.b32.cont [12/16] 0.0, 128
        %1735 = vxpose.xlu0.b32.cont [13/16] 0.0, 128
        %1736 = vxpose.xlu0.b32.cont [14/16] 0.0, 128
        %1737 = vxpose.xlu0.b32.cont [15/16] 0.0, 128
        %1738 = vxpose.xlu0.b32.end [16/16] 0.0, 128
        %v1739 = vpop.trf.xlu0
        %v1740 = vpop.trf.xlu0
        %v1741 = vpop.trf.xlu0
        %v1742 = vpop.trf.xlu0
        %v1743 = vpop.trf.xlu0
        %v1744 = vpop.trf.xlu0
        %v1745 = vpop.trf.xlu0
        %v1746 = vpop.trf.xlu0
        %v1747 = vpop.trf.xlu0
        %v1748 = vpop.trf.xlu0
        %v1749 = vpop.trf.xlu0
        %v1750 = vpop.trf.xlu0
        %v1751 = vpop.trf.xlu0
        %v1752 = vpop.trf.xlu0
        %v1753 = vpop.trf.xlu0
        %v1754 = vpop.trf.xlu0
        %1755 = vxpose.xlu0.b32.start [1/16] %v1643, 128
        %1756 = vxpose.xlu0.b32.cont [2/16] %v1675, 128
        %1757 = vxpose.xlu0.b32.cont [3/16] %v1707, 128
        %1758 = vxpose.xlu0.b32.cont [4/16] %v1739, 128
        %1759 = vxpose.xlu0.b32.cont [5/16] 0.0, 128
        %1760 = vxpose.xlu0.b32.cont [6/16] 0.0, 128
        %1761 = vxpose.xlu0.b32.cont [7/16] 0.0, 128
        %1762 = vxpose.xlu0.b32.cont [8/16] 0.0, 128
        %1763 = vxpose.xlu0.b32.cont [9/16] 0.0, 128
        %1764 = vxpose.xlu0.b32.cont [10/16] 0.0, 128
        %1765 = vxpose.xlu0.b32.cont [11/16] 0.0, 128
        %1766 = vxpose.xlu0.b32.cont [12/16] 0.0, 128
        %1767 = vxpose.xlu0.b32.cont [13/16] 0.0, 128
        %1768 = vxpose.xlu0.b32.cont [14/16] 0.0, 128
        %1769 = vxpose.xlu0.b32.cont [15/16] 0.0, 128
        %1770 = vxpose.xlu0.b32.end [16/16] 0.0, 128
        %v1771 = vpop.trf.xlu0
        %v1772 = vpop.trf.xlu0
        %v1773 = vpop.trf.xlu0
        %v1774 = vpop.trf.xlu0
        %v1775 = vpop.trf.xlu0
        %v1776 = vpop.trf.xlu0
        %v1777 = vpop.trf.xlu0
        %v1778 = vpop.trf.xlu0
        %v1779 = vpop.trf.xlu0
        %v1780 = vpop.trf.xlu0
        %v1781 = vpop.trf.xlu0
        %v1782 = vpop.trf.xlu0
        %v1783 = vpop.trf.xlu0
        %v1784 = vpop.trf.xlu0
        %v1785 = vpop.trf.xlu0
        %v1786 = vpop.trf.xlu0
        %v1787 = vld [vmem:[#allocation15] sm:$0xff]
        %v1788 = vld [vmem:[#allocation15 + $0x8] sm:$0xff]
        %v1789 = vld [vmem:[#allocation15 + $0x10] sm:$0xff]
        %v1790 = vld [vmem:[#allocation15 + $0x18] sm:$0xff]
        %v1791 = vld [vmem:[#allocation16] sm:$0x1]
        %v1793 = vlaneseq
        %v1794 = vshrl.u32 %v1793, 7
        %v1795 = vsub.s32 0, %v1794
        %v1796 = vrot.slane %v1791, %v1795
        %v1799 = vsel %vm729, %v1771, 0
        %1801 = vmatprep.subr.mxu0 0.0
        %1802 = vmatpush1.msra.mxu0 %v1787
        %1803 = vmatprep.subr.mxu0 0.0
        %1804 = vmatpush1.msra.mxu0 %v1788
        %1805 = vmatprep.subr.mxu0 0.0
        %1806 = vmatpush1.msra.mxu0 %v1789
        %1807 = vmatprep.subr.mxu0 0.0
        %1808 = vmatpush1.msra.mxu0 %v1790
        %1809 = vmatprep.subr.mxu0 0.0
        %1810 = vmatpush1.msra.mxu0 0.0
        %1811 = vmatprep.subr.mxu0 0.0
        %1812 = vmatpush1.msra.mxu0 0.0
        %1813 = vmatprep.subr.mxu0 0.0
        %1814 = vmatpush1.msra.mxu0 0.0
        %1815 = vmatprep.subr.mxu0 0.0
        %1816 = vmatpush1.msra.mxu0 0.0
        %1817 = vmatprep.subr.mxu0 0.0
        %1818 = vmatpush1.msra.mxu0 0.0
        %1819 = vmatprep.subr.mxu0 0.0
        %1820 = vmatpush1.msra.mxu0 0.0
        %1821 = vmatprep.subr.mxu0 0.0
        %1822 = vmatpush1.msra.mxu0 0.0
        %1823 = vmatprep.subr.mxu0 0.0
        %1824 = vmatpush1.msra.mxu0 0.0
        %1825 = vmatprep.subr.mxu0 0.0
        %1826 = vmatpush1.msra.mxu0 0.0
        %1827 = vmatprep.subr.mxu0 0.0
        %1828 = vmatpush1.msra.mxu0 0.0
        %1829 = vmatprep.subr.mxu0 0.0
        %1830 = vmatpush1.msra.mxu0 0.0
        %1831 = vmatprep.subr.mxu0 0.0
        %1832 = vmatpush1.msra.mxu0 0.0
        %1833 = vmatprep.subr.mxu0 0.0
        %1834 = vmatpush1.msra.mxu0 0.0
        %1835 = vmatprep.subr.mxu0 0.0
        %1836 = vmatpush1.msra.mxu0 0.0
        %1837 = vmatprep.subr.mxu0 0.0
        %1838 = vmatpush1.msra.mxu0 0.0
        %1839 = vmatprep.subr.mxu0 0.0
        %1840 = vmatpush1.msra.mxu0 0.0
        %1841 = vmatprep.subr.mxu0 0.0
        %1842 = vmatpush1.msra.mxu0 0.0
        %1843 = vmatprep.subr.mxu0 0.0
        %1844 = vmatpush1.msra.mxu0 0.0
        %1845 = vmatprep.subr.mxu0 0.0
        %1846 = vmatpush1.msra.mxu0 0.0
        %1847 = vmatprep.subr.mxu0 0.0
        %1848 = vmatpush1.msra.mxu0 0.0
        %1849 = vmatprep.subr.mxu0 0.0
        %1850 = vmatpush1.msra.mxu0 0.0
        %1851 = vmatprep.subr.mxu0 0.0
        %1852 = vmatpush1.msra.mxu0 0.0
        %1853 = vmatprep.subr.mxu0 0.0
        %1854 = vmatpush1.msra.mxu0 0.0
        %1855 = vmatprep.subr.mxu0 0.0
        %1856 = vmatpush1.msra.mxu0 0.0
        %1857 = vmatprep.subr.mxu0 0.0
        %1858 = vmatpush1.msra.mxu0 0.0
        %1859 = vmatprep.subr.mxu0 0.0
        %1860 = vmatpush1.msra.mxu0 0.0
        %1861 = vmatprep.subr.mxu0 0.0
        %1862 = vmatpush1.msra.mxu0 0.0
        %1863 = vmatprep.subr.mxu0 0.0
        %1864 = vmatpush1.msra.mxu0 0.0
        %1865 = vmatprep.mubr.f32.mxu0 0.0
        %1866 = vmatmul.mubr.f32.gmra.mrb[0].mxu0 %v1799
        %v1867 = vpop.f32.mrb[0].mxu0
        %v1868 = vadd.f32 %v1796, %v1867
        %v1869 = vpop.f32.mrb[0].mxu0
        %1870 = vdwg.mxu0
        %1871 = vst.msk [vmem:[%s455] sm:$0xff] %vm729, %v1868
        %s1872 = sand.u32 %s233, 1
        %s1873 = scalar_lea.sflag [#allocation6], %s1872
        %s1874 = sand.u32 %s233, 1
        %s1875 = smul.addr %s1874, 8
        %s1876 = scalar_lea.vmem [#allocation18], %s1875
        // Predicated region
        $region89: #{tpu_custom_call.1} parent=51 // pred_check
          %p1877 = pneg %p243
        $region90: #{tpu_custom_call.1} parent=51 // pred_check_branch
          %1879 = sbr.rel (%p1877) target = $region92
        $region91: #{tpu_custom_call.1} parent=51 // pred_region
          %s1881 = ssub.s32 128, 128
          %1882 = vsyncadd %s1873, %s1881
          %s1883 = sadd.s32 %s36, %s35
          %s1884 = smul.addr %s1883, 128
          %s1885 = scalar_lea.hbm %s8, %s1884
          %s1887 = sshll.u32 %s1876, 4
          %s1888 = int_to_ptr.vmem [resolvable:$true] %s1887
          %1890 = dma.vmem_to_hbm [thread:$0]  %s1888, 128, %s1885, %s1873
        $region92: #{tpu_custom_call.1} parent=51 // pred_fallthru
          _
      $region52: #{tpu_custom_call.1} parent=5 // pred_fallthru
        _
      %p1891 = scmp.le.s32.totalorder 2, %s26
      // Predicated region
      $region93: #{tpu_custom_call.1} parent=5 // pred_check
        %p1892 = pneg %p1891
      $region94: #{tpu_custom_call.1} parent=5 // pred_check_branch
        %1894 = sbr.rel (%p1892) target = $region96
      $region95: #{tpu_custom_call.1} parent=5 // pred_region
        %s1895 = ssub.s32 %s26, 2
        // Predicated region
        $region97: #{tpu_custom_call.1} parent=95 // pred_check
          %p1896 = pneg %p249
        $region98: #{tpu_custom_call.1} parent=95 // pred_check_branch
          %1898 = sbr.rel (%p1896) target = $region100
        $region99: #{tpu_custom_call.1} parent=95 // pred_region
          %s1899 = sand.u32 %s234, 1
          %s1900 = scalar_lea.sflag [#allocation6], %s1899
          %s1901 = sand.u32 %s234, 1
          %s1902 = smul.addr %s1901, 8
          %s1903 = scalar_lea.vmem [#allocation18], %s1902
          %1904 = dma.done %s1900, 128
        $region100: #{tpu_custom_call.1} parent=95 // pred_fallthru
          _
      $region96: #{tpu_custom_call.1} parent=5 // pred_fallthru
        _
    $region6: #{tpu_custom_call.1} parent=1 // loop_footer
      %s30 = sadd.s32 1, %s26
    $region7: #{tpu_custom_call.1} parent=1 // loop_footer_branch
      %25 = sbr.rel target = $region3
    $region8: #{tpu_custom_call.1} parent=1 // loop_exit
      _
    %1905 = vsyncpa [#allocation5], 1
    %s1906 = scalar_lea.sflag [#allocation5], 1
    %1907 = vsyncpa %s1906, 1
    %1908 = vsyncpa [#allocation8], 1
    %s1909 = scalar_lea.sflag [#allocation8], 1
    %1910 = vsyncpa %s1909, 1
    %1911 = vsyncpa [#allocation11], 1
    %1912 = vsyncpa [#allocation14], 1
    %1913 = vsyncpa [#allocation17], 1
    %1914 = vsyncpa [#allocation6], 1
    %s1915 = scalar_lea.sflag [#allocation6], 1
    %1916 = vsyncpa %s1915, 1

</llo_original>
